<compile_context>
chip_gen: v7x
topology: tpu7x:2x2x1
jax: 0.10.0
libtpu: 0.0.40
codegen_flags: <defaults>
</compile_context>

<pallas_src>
import functools

import jax
import jax.numpy as jnp
from jax.experimental import pallas as pl
from jax.experimental.pallas import tpu as pltpu

EPS = 1e-3
_VMEM_LIMIT = 32 * 1024 * 1024        # scoped VMEM request (safe on v5e/v6e/v7x)
_FUSED_VMEM_BUDGET = 24 * 1024 * 1024  # guard for the VMEM-cached-y1 variant (v7x)
_TILE_L_CAP = 2048                     # lane-tile cap (multiple of 128)
_BATCH_BLOCK_BYTES = 1 << 20           # target per-step x DMA size


def _round_up(x, m):
    return ((x + m - 1) // m) * m


def _pick_batch_block(n, c_in, tile_l):
    """Largest divisor of n (<=8) keeping the x block under ~1 MiB."""
    best = 1
    for b in range(1, min(n, 8) + 1):
        if n % b == 0 and b * c_in * tile_l * 4 <= _BATCH_BLOCK_BYTES:
            best = b
    return best


# ---------------------------------------------------------------------------
# Fused single-call variant: y1 cached in VMEM (phase 0 = stats, phase 1 = apply)
# ---------------------------------------------------------------------------
def _fused_call(x3, w1m, w2m, gamma2, beta2, *, tile_l, nt, b_blk, eps):
    n, c_in, L = x3.shape
    c_mid = w1m.shape[0]
    c_out = w2m.shape[0]
    nb = n // b_blk
    inv_m = 1.0 / float(n * L)          # true element count (padding excluded)
    ragged = (nt * tile_l != L)

    def kernel(x_ref, w1_ref, w2_ref, g_ref, bta_ref, o_ref,
               y1_cache, sum_ref, sumsq_ref):
        phase = pl.program_id(0)
        bi = pl.program_id(1)
        li = pl.program_id(2)

        @pl.when(phase == 0)
        def _stats_phase():
            @pl.when((bi == 0) & (li == 0))
            def _init():
                sum_ref[...] = jnp.zeros_like(sum_ref)
                sumsq_ref[...] = jnp.zeros_like(sumsq_ref)

            if ragged:
                lane = jax.lax.broadcasted_iota(jnp.int32, (1, tile_l), 1)
                valid = (lane + li * tile_l) < L
            for b in range(b_blk):                        # static unroll
                xr = jnp.maximum(x_ref[b], 0.0)           # (c_in, tile_l)
                y1 = jnp.dot(w1_ref[...], xr,
                             preferred_element_type=jnp.float32)  # (c_mid, tile_l)
                if ragged:
                    # Mask BEFORE both sums so padded lanes never contribute.
                    y1 = jnp.where(valid, y1, 0.0)
                slot = (bi * b_blk + b) * nt + li
                y1_cache[slot] = y1
                sum_ref[...] += jnp.sum(y1, axis=1, keepdims=True)
                sumsq_ref[...] += jnp.sum(y1 * y1, axis=1, keepdims=True)

        @pl.when(phase == 1)
        def _apply_phase():
            mean = sum_ref[...] * inv_m                              # (c_mid, 1)
            var = jnp.maximum(sumsq_ref[...] * inv_m - mean * mean, 0.0)
            scale = g_ref[...] * jax.lax.rsqrt(var + eps)            # (c_mid, 1)
            shift = bta_ref[...] - mean * scale
            for b in range(b_blk):
                slot = (bi * b_blk + b) * nt + li
                yn = y1_cache[slot] * scale + shift                  # (c_mid, tile_l)
                o_ref[b] = jnp.dot(w2_ref[...], yn,
                                   preferred_element_type=jnp.float32)

    # Phase-dependent index maps (pure int arithmetic, p in {0,1}):
    #  * x is fetched only in phase 0; in phase 1 it is pinned to the last
    #    fetched block so no DMA is issued (block index never changes).
    #  * output is pinned to block (0,0,0) in phase 0 (never written, never
    #    flushed) and streamed out in phase 1.
    def x_map(p, bi, li):
        keep = 1 - p
        return (bi * keep + (nb - 1) * p, 0, li * keep + (nt - 1) * p)

    def o_map(p, bi, li):
        return (bi * p, 0, li * p)

    const2 = lambda p, bi, li: (0, 0)

    cost = pl.CostEstimate(
        flops=2 * n * L * c_in * c_mid + 2 * n * L * c_mid * c_out + 6 * n * L * c_mid,
        transcendentals=0,
        bytes_accessed=4 * (n * c_in * L + n * c_out * L),
    )

    out3 = pl.pallas_call(
        kernel,
        out_shape=jax.ShapeDtypeStruct((n, c_out, L), jnp.float32),
        grid=(2, nb, nt),
        in_specs=[
            pl.BlockSpec((b_blk, c_in, tile_l), x_map),
            pl.BlockSpec((c_mid, c_in), const2),
            pl.BlockSpec((c_out, c_mid), const2),
            pl.BlockSpec((c_mid, 1), const2),
            pl.BlockSpec((c_mid, 1), const2),
        ],
        out_specs=pl.BlockSpec((b_blk, c_out, tile_l), o_map),
        scratch_shapes=[
            pltpu.VMEM((nb * nt * b_blk, c_mid, tile_l), jnp.float32),  # y1 cache
            pltpu.VMEM((c_mid, 1), jnp.float32),                        # sum acc
            pltpu.VMEM((c_mid, 1), jnp.float32),                        # sumsq acc
        ],
        compiler_params=pltpu.CompilerParams(
            # Phase ordering + shared accumulators/cache require sequential grid.
            dimension_semantics=("arbitrary", "arbitrary", "arbitrary"),
            vmem_limit_bytes=_VMEM_LIMIT,
        ),
        cost_estimate=cost,
    )(x3, w1m, w2m, gamma2, beta2)
    return out3


# ---------------------------------------------------------------------------
# Two-pass fallback: y1 goes through HBM (for activations too big to cache)
# ---------------------------------------------------------------------------
def _two_pass_call(x3, w1m, w2m, gamma, beta, *, tile_l, nt, b_blk, eps):
    n, c_in, L = x3.shape
    c_mid = w1m.shape[0]
    c_out = w2m.shape[0]
    nb = n // b_blk
    m_count = float(n * L)
    ragged = (nt * tile_l != L)

    # --- pass 1: y1 = W1 @ relu(x) + per-tile partial sums (fully parallel) ---
    def stats_kernel(x_ref, w1_ref, y1_ref, ps_ref, pss_ref):
        li = pl.program_id(1)
        if ragged:
            lane = jax.lax.broadcasted_iota(jnp.int32, (1, tile_l), 1)
            valid = (lane + li * tile_l) < L
        s = jnp.zeros((c_mid, 1), jnp.float32)
        ss = jnp.zeros((c_mid, 1), jnp.float32)
        for b in range(b_blk):
            xr = jnp.maximum(x_ref[b], 0.0)
            y1 = jnp.dot(w1_ref[...], xr, preferred_element_type=jnp.float32)
            if ragged:
                y1 = jnp.where(valid, y1, 0.0)
            y1_ref[b] = y1
            s = s + jnp.sum(y1, axis=1, keepdims=True)
            ss = ss + jnp.sum(y1 * y1, axis=1, keepdims=True)
        ps_ref[0, 0] = s
        pss_ref[0, 0] = ss

    y1, psum, psumsq = pl.pallas_call(
        stats_kernel,
        out_shape=(
            jax.ShapeDtypeStruct((n, c_mid, L), jnp.float32),
            jax.ShapeDtypeStruct((nb, nt, c_mid, 1), jnp.float32),
            jax.ShapeDtypeStruct((nb, nt, c_mid, 1), jnp.float32),
        ),
        grid=(nb, nt),
        in_specs=[
            pl.BlockSpec((b_blk, c_in, tile_l), lambda bi, li: (bi, 0, li)),
            pl.BlockSpec((c_mid, c_in), lambda bi, li: (0, 0)),
        ],
        out_specs=[
            pl.BlockSpec((b_blk, c_mid, tile_l), lambda bi, li: (bi, 0, li)),
            pl.BlockSpec((1, 1, c_mid, 1), lambda bi, li: (bi, li, 0, 0)),
            pl.BlockSpec((1, 1, c_mid, 1), lambda bi, li: (bi, li, 0, 0)),
        ],
        compiler_params=pltpu.CompilerParams(
            dimension_semantics=("parallel", "parallel"),
            vmem_limit_bytes=_VMEM_LIMIT,
        ),
    )(x3, w1m)

    total_sum = jnp.sum(psum[..., 0], axis=(0, 1))       # (c_mid,)
    total_sq = jnp.sum(psumsq[..., 0], axis=(0, 1))
    mean = total_sum / m_count
    var = jnp.maximum(total_sq / m_count - mean * mean, 0.0)   # biased (training BN)
    scale = gamma * jax.lax.rsqrt(var + eps)
    shift = beta - mean * scale
    scale2 = scale[:, None]                               # (c_mid, 1)
    shift2 = shift[:, None]

    # --- pass 2: o = W2 @ (y1*scale + shift) ---------------------------------
    def apply_kernel(y1_ref, w2_ref, sc_ref, sh_ref, o_ref):
        for b in range(b_blk):
            yn = y1_ref[b] * sc_ref[...] + sh_ref[...]
            o_ref[b] = jnp.dot(w2_ref[...], yn, preferred_element_type=jnp.float32)

    out3 = pl.pallas_call(
        apply_kernel,
        out_shape=jax.ShapeDtypeStruct((n, c_out, L), jnp.float32),
        grid=(nb, nt),
        in_specs=[
            pl.BlockSpec((b_blk, c_mid, tile_l), lambda bi, li: (bi, 0, li)),
            pl.BlockSpec((c_out, c_mid), lambda bi, li: (0, 0)),
            pl.BlockSpec((c_mid, 1), lambda bi, li: (0, 0)),
            pl.BlockSpec((c_mid, 1), lambda bi, li: (0, 0)),
        ],
        out_specs=pl.BlockSpec((b_blk, c_out, tile_l), lambda bi, li: (bi, 0, li)),
        compiler_params=pltpu.CompilerParams(
            dimension_semantics=("parallel", "parallel"),
            vmem_limit_bytes=_VMEM_LIMIT,
        ),
    )(y1, w2m, scale2, shift2)
    return out3


# ---------------------------------------------------------------------------
# Public wrapper
# ---------------------------------------------------------------------------
def fused_forward(x_nchw, w1, w2, gamma, beta, *, eps=EPS, force_two_pass=False):
    """x_nchw: (N, 72, H, W) f32 -> (N, 88, H, W) f32 (training-mode BN)."""
    n, c_in, h, w = x_nchw.shape
    c_mid = w1.shape[0]
    c_out = w2.shape[0]
    L = h * w

    x3 = x_nchw.reshape(n, c_in, L).astype(jnp.float32)
    w1m = w1.reshape(c_mid, c_in).astype(jnp.float32)    # (24, 72)
    w2m = w2.reshape(c_out, c_mid).astype(jnp.float32)   # (88, 24)
    gamma = gamma.astype(jnp.float32)
    beta = beta.astype(jnp.float32)

    # Lane tile: multiple of 128, capped; ragged tails handled in-kernel.
    tile_l = min(_round_up(L, 128), _TILE_L_CAP)
    nt = -(-L // tile_l)
    b_blk = _pick_batch_block(n, c_in, tile_l)

    # VMEM budget for the fused (y1-cached) variant; fall back on overshoot
    # (keeps v7x's 64 MiB physical / 32 MiB scoped limit safe).
    fused_vmem = (
        n * nt * c_mid * tile_l * 4            # y1 cache
        + 2 * b_blk * c_in * tile_l * 4        # double-buffered x tiles
        + 2 * b_blk * c_out * tile_l * 4       # double-buffered output tiles
        + 4 * (c_mid * c_in + c_out * c_mid + 2 * c_mid)
        + (1 << 16)
    )

    if force_two_pass or fused_vmem > _FUSED_VMEM_BUDGET:
        out3 = _two_pass_call(x3, w1m, w2m, gamma, beta,
                              tile_l=tile_l, nt=nt, b_blk=b_blk, eps=eps)
    else:
        out3 = _fused_call(x3, w1m, w2m, gamma[:, None], beta[:, None],
                           tile_l=tile_l, nt=nt, b_blk=b_blk, eps=eps)
    return out3.reshape(n, c_out, h, w)


def _reference(x_nchw, w1, w2, gamma, beta, eps=EPS):
    """Pure-JAX reference of the same forward pass (training-mode BN)."""
    c_mid, c_in = w1.shape[0], w1.shape[1]
    c_out = w2.shape[0]
    xr = jnp.maximum(x_nchw, 0.0)
    y1 = jnp.einsum("oc,nchw->nohw", w1.reshape(c_mid, c_in), xr)
    mean = jnp.mean(y1, axis=(0, 2, 3), keepdims=True)
    var = jnp.mean((y1 - mean) ** 2, axis=(0, 2, 3), keepdims=True)
    yn = (y1 - mean) * jax.lax.rsqrt(var + eps)
    yn = yn * gamma[None, :, None, None] + beta[None, :, None, None]
    return jnp.einsum("oc,nchw->nohw", w2.reshape(c_out, c_mid), yn)


if __name__ == "__main__":
    key = jax.random.PRNGKey(0)
    k_x1, k_x2, k_w1, k_w2, k_g, k_b = jax.random.split(key, 6)

    # Channel sizes (72 -> 24 -> 88) are fixed by the module.
    w1 = jax.random.normal(k_w1, (24, 72, 1, 1), dtype=jnp.float32) * 0.1   # conv2d7
    w2 = jax.random.normal(k_w2, (88, 24, 1, 1), dtype=jnp.float32) * 0.1   # conv2d8
    gamma = 1.0 + 0.1 * jax.random.normal(k_g, (24,), dtype=jnp.float32)    # bn weight
    beta = 0.1 * jax.random.normal(k_b, (24,), dtype=jnp.float32)           # bn bias

    fwd = jax.jit(fused_forward)
    fwd_2p = jax.jit(functools.partial(fused_forward, force_two_pass=True))

    # Case 1: small batch, lane-aligned spatial (fused VMEM-cached path).
    x_a = jax.random.normal(k_x1, (2, 72, 16, 16), dtype=jnp.float32)
    out_a = jax.block_until_ready(fwd(x_a, w1, w2, gamma, beta))
    ref_a = _reference(x_a, w1, w2, gamma, beta)
    assert out_a.shape == (2, 88, 16, 16)
    assert jnp.allclose(out_a, ref_a, atol=5e-4, rtol=5e-4), float(
        jnp.max(jnp.abs(out_a - ref_a)))

    # Case 2: the module's spec shape (1, 72, 28, 28): L=784 is ragged -> exercises
    # in-kernel lane masking (no host-side pad/slice).
    x_b = jax.random.normal(k_x2, (1, 72, 28, 28), dtype=jnp.float32)
    out_b = jax.block_until_ready(fwd(x_b, w1, w2, gamma, beta))
    ref_b = _reference(x_b, w1, w2, gamma, beta)
    assert out_b.shape == (1, 88, 28, 28)
    assert jnp.allclose(out_b, ref_b, atol=5e-4, rtol=5e-4), float(
        jnp.max(jnp.abs(out_b - ref_b)))

    # Case 3: force the large-activation fallback (HBM y1 intermediate, two passes).
    out_c = jax.block_until_ready(fwd_2p(x_b, w1, w2, gamma, beta))
    assert jnp.allclose(out_c, ref_b, atol=5e-4, rtol=5e-4), float(
        jnp.max(jnp.abs(out_c - ref_b)))

    print("KERNEL_OK")
</pallas_src>

<mosaic_0001>
module attributes {stable_mosaic.version = 11 : i64} {
  func.func @kernel(%arg0: i32, %arg1: i32, %arg2: i32, %arg3: memref<2x72x256xf32, #tpu.memory_space<vmem>>, %arg4: memref<24x72xf32, #tpu.memory_space<vmem>>, %arg5: memref<88x24xf32, #tpu.memory_space<vmem>>, %arg6: memref<24x1xf32, #tpu.memory_space<vmem>>, %arg7: memref<24x1xf32, #tpu.memory_space<vmem>>, %arg8: memref<2x88x256xf32, #tpu.memory_space<vmem>>, %arg9: memref<2x24x256xf32, #tpu.memory_space<vmem>>, %arg10: memref<24x1xf32, #tpu.memory_space<vmem>>, %arg11: memref<24x1xf32, #tpu.memory_space<vmem>>) attributes {dimension_semantics = [#tpu.dimension_semantics<arbitrary>, #tpu.dimension_semantics<arbitrary>, #tpu.dimension_semantics<arbitrary>], iteration_bounds = array<i64: 2, 1, 1>, scalar_prefetch = 0 : i64, scratch_operands = 3 : i64, tpu.core_type = #tpu.core_type<tc>, window_params = [{transform_indices = @transform_0, window_bounds = array<i64: 2, 72, 256>}, {pipeline_mode = #tpu.pipeline_mode<synchronous>, transform_indices = @transform_1, window_bounds = array<i64: 24, 72>}, {pipeline_mode = #tpu.pipeline_mode<synchronous>, transform_indices = @transform_2, window_bounds = array<i64: 88, 24>}, {pipeline_mode = #tpu.pipeline_mode<synchronous>, transform_indices = @transform_3, window_bounds = array<i64: 24, 1>}, {pipeline_mode = #tpu.pipeline_mode<synchronous>, transform_indices = @transform_4, window_bounds = array<i64: 24, 1>}, {transform_indices = @transform_5, window_bounds = array<i64: 2, 88, 256>}]} {
    %c0_i32 = arith.constant 0 : i32
    %0 = arith.cmpi eq, %arg0, %c0_i32 : i32
    %1 = arith.extui %0 : i1 to i32
    %c0_i32_0 = arith.constant 0 : i32
    %2 = arith.cmpi ne, %1, %c0_i32_0 : i32
    scf.if %2 {
      %c0_i32_2 = arith.constant 0 : i32
      %6 = arith.cmpi eq, %arg1, %c0_i32_2 : i32
      %c0_i32_3 = arith.constant 0 : i32
      %7 = arith.cmpi eq, %arg2, %c0_i32_3 : i32
      %8 = arith.andi %6, %7 : i1
      %9 = arith.extui %8 : i1 to i32
      %c0_i32_4 = arith.constant 0 : i32
      %10 = arith.cmpi ne, %9, %c0_i32_4 : i32
      scf.if %10 {
        %cst_45 = arith.constant 0.000000e+00 : f32
        %61 = vector.broadcast %cst_45 : f32 to vector<24x1xf32>
        %c0_46 = arith.constant 0 : index
        %c0_47 = arith.constant 0 : index
        %62 = vector.load %arg10[%c0_46, %c0_47] : memref<24x1xf32, #tpu.memory_space<vmem>>, vector<24x1xf32>
        tpu.vector_store %arg10[%c0_46, %c0_47], %61 {strides = array<i32>} : memref<24x1xf32, #tpu.memory_space<vmem>>, vector<24x1xf32>,
        %cst_48 = arith.constant 0.000000e+00 : f32
        %63 = vector.broadcast %cst_48 : f32 to vector<24x1xf32>
        %c0_49 = arith.constant 0 : index
        %c0_50 = arith.constant 0 : index
        %64 = vector.load %arg11[%c0_49, %c0_50] : memref<24x1xf32, #tpu.memory_space<vmem>>, vector<24x1xf32>
        tpu.vector_store %arg11[%c0_49, %c0_50], %63 {strides = array<i32>} : memref<24x1xf32, #tpu.memory_space<vmem>>, vector<24x1xf32>,
      } else {
      }
      %c0 = arith.constant 0 : index
      %c0_5 = arith.constant 0 : index
      %c0_6 = arith.constant 0 : index
      %11 = vector.load %arg3[%c0, %c0_5, %c0_6] : memref<2x72x256xf32, #tpu.memory_space<vmem>>, vector<1x72x256xf32>
      %12 = vector.shape_cast %11 : vector<1x72x256xf32> to vector<72x256xf32>
      %cst = arith.constant 0.000000e+00 : f32
      %13 = vector.broadcast %cst : f32 to vector<72x256xf32>
      %14 = arith.maximumf %12, %13 : vector<72x256xf32>
      %c0_7 = arith.constant 0 : index
      %c0_8 = arith.constant 0 : index
      %15 = vector.load %arg4[%c0_7, %c0_8] : memref<24x72xf32, #tpu.memory_space<vmem>>, vector<24x72xf32>
      %cst_9 = arith.constant dense<0.000000e+00> : vector<24x256xf32>
      %16 = tpu.matmul %15, %14, %cst_9 {dimension_numbers = #tpu.dot_dimension_numbers<[1], [0], [0], [1], [0, 0, 1, 1], [], []>} : vector<24x72xf32>, vector<72x256xf32>, vector<24x256xf32> -> vector<24x256xf32>
      %c2_i32 = arith.constant 2 : i32
      %17 = arith.muli %arg1, %c2_i32 : i32
      %c0_i32_10 = arith.constant 0 : i32
      %18 = arith.addi %17, %c0_i32_10 : i32
      %c1_i32_11 = arith.constant 1 : i32
      %19 = arith.muli %18, %c1_i32_11 : i32
      %20 = arith.addi %19, %arg2 : i32
      %21 = arith.index_cast %20 : i32 to index
      %c0_12 = arith.constant 0 : index
      %c0_13 = arith.constant 0 : index
      %22 = vector.load %arg9[%21, %c0_12, %c0_13] : memref<2x24x256xf32, #tpu.memory_space<vmem>>, vector<1x24x256xf32>
      %23 = vector.shape_cast %22 : vector<1x24x256xf32> to vector<24x256xf32>
      %24 = vector.shape_cast %16 : vector<24x256xf32> to vector<1x24x256xf32>
      tpu.vector_store %arg9[%21, %c0_12, %c0_13], %24 {strides = array<i32>} : memref<2x24x256xf32, #tpu.memory_space<vmem>>, vector<1x24x256xf32>,
      %c0_14 = arith.constant 0 : index
      %c0_15 = arith.constant 0 : index
      %25 = vector.load %arg10[%c0_14, %c0_15] : memref<24x1xf32, #tpu.memory_space<vmem>>, vector<24x1xf32>
      %cst_16 = arith.constant dense<0.000000e+00> : vector<24xf32>
      %26 = vector.multi_reduction <add>, %16, %cst_16 [1] : vector<24x256xf32> to vector<24xf32>
      %27 = vector.shape_cast %26 : vector<24xf32> to vector<24x1xf32>
      %28 = arith.addf %25, %27 : vector<24x1xf32>
      %c0_17 = arith.constant 0 : index
      %c0_18 = arith.constant 0 : index
      %29 = vector.load %arg10[%c0_17, %c0_18] : memref<24x1xf32, #tpu.memory_space<vmem>>, vector<24x1xf32>
      tpu.vector_store %arg10[%c0_17, %c0_18], %28 {strides = array<i32>} : memref<24x1xf32, #tpu.memory_space<vmem>>, vector<24x1xf32>,
      %c0_19 = arith.constant 0 : index
      %c0_20 = arith.constant 0 : index
      %30 = vector.load %arg11[%c0_19, %c0_20] : memref<24x1xf32, #tpu.memory_space<vmem>>, vector<24x1xf32>
      %31 = arith.mulf %16, %16 : vector<24x256xf32>
      %cst_21 = arith.constant dense<0.000000e+00> : vector<24xf32>
      %32 = vector.multi_reduction <add>, %31, %cst_21 [1] : vector<24x256xf32> to vector<24xf32>
      %33 = vector.shape_cast %32 : vector<24xf32> to vector<24x1xf32>
      %34 = arith.addf %30, %33 : vector<24x1xf32>
      %c0_22 = arith.constant 0 : index
      %c0_23 = arith.constant 0 : index
      %35 = vector.load %arg11[%c0_22, %c0_23] : memref<24x1xf32, #tpu.memory_space<vmem>>, vector<24x1xf32>
      tpu.vector_store %arg11[%c0_22, %c0_23], %34 {strides = array<i32>} : memref<24x1xf32, #tpu.memory_space<vmem>>, vector<24x1xf32>,
      %c1 = arith.constant 1 : index
      %c0_24 = arith.constant 0 : index
      %c0_25 = arith.constant 0 : index
      %36 = vector.load %arg3[%c1, %c0_24, %c0_25] : memref<2x72x256xf32, #tpu.memory_space<vmem>>, vector<1x72x256xf32>
      %37 = vector.shape_cast %36 : vector<1x72x256xf32> to vector<72x256xf32>
      %cst_26 = arith.constant 0.000000e+00 : f32
      %38 = vector.broadcast %cst_26 : f32 to vector<72x256xf32>
      %39 = arith.maximumf %37, %38 : vector<72x256xf32>
      %c0_27 = arith.constant 0 : index
      %c0_28 = arith.constant 0 : index
      %40 = vector.load %arg4[%c0_27, %c0_28] : memref<24x72xf32, #tpu.memory_space<vmem>>, vector<24x72xf32>
      %cst_29 = arith.constant dense<0.000000e+00> : vector<24x256xf32>
      %41 = tpu.matmul %40, %39, %cst_29 {dimension_numbers = #tpu.dot_dimension_numbers<[1], [0], [0], [1], [0, 0, 1, 1], [], []>} : vector<24x72xf32>, vector<72x256xf32>, vector<24x256xf32> -> vector<24x256xf32>
      %c2_i32_30 = arith.constant 2 : i32
      %42 = arith.muli %arg1, %c2_i32_30 : i32
      %c1_i32_31 = arith.constant 1 : i32
      %43 = arith.addi %42, %c1_i32_31 : i32
      %c1_i32_32 = arith.constant 1 : i32
      %44 = arith.muli %43, %c1_i32_32 : i32
      %45 = arith.addi %44, %arg2 : i32
      %46 = arith.index_cast %45 : i32 to index
      %c0_33 = arith.constant 0 : index
      %c0_34 = arith.constant 0 : index
      %47 = vector.load %arg9[%46, %c0_33, %c0_34] : memref<2x24x256xf32, #tpu.memory_space<vmem>>, vector<1x24x256xf32>
      %48 = vector.shape_cast %47 : vector<1x24x256xf32> to vector<24x256xf32>
      %49 = vector.shape_cast %41 : vector<24x256xf32> to vector<1x24x256xf32>
      tpu.vector_store %arg9[%46, %c0_33, %c0_34], %49 {strides = array<i32>} : memref<2x24x256xf32, #tpu.memory_space<vmem>>, vector<1x24x256xf32>,
      %c0_35 = arith.constant 0 : index
      %c0_36 = arith.constant 0 : index
      %50 = vector.load %arg10[%c0_35, %c0_36] : memref<24x1xf32, #tpu.memory_space<vmem>>, vector<24x1xf32>
      %cst_37 = arith.constant dense<0.000000e+00> : vector<24xf32>
      %51 = vector.multi_reduction <add>, %41, %cst_37 [1] : vector<24x256xf32> to vector<24xf32>
      %52 = vector.shape_cast %51 : vector<24xf32> to vector<24x1xf32>
      %53 = arith.addf %50, %52 : vector<24x1xf32>
      %c0_38 = arith.constant 0 : index
      %c0_39 = arith.constant 0 : index
      %54 = vector.load %arg10[%c0_38, %c0_39] : memref<24x1xf32, #tpu.memory_space<vmem>>, vector<24x1xf32>
      tpu.vector_store %arg10[%c0_38, %c0_39], %53 {strides = array<i32>} : memref<24x1xf32, #tpu.memory_space<vmem>>, vector<24x1xf32>,
      %c0_40 = arith.constant 0 : index
      %c0_41 = arith.constant 0 : index
      %55 = vector.load %arg11[%c0_40, %c0_41] : memref<24x1xf32, #tpu.memory_space<vmem>>, vector<24x1xf32>
      %56 = arith.mulf %41, %41 : vector<24x256xf32>
      %cst_42 = arith.constant dense<0.000000e+00> : vector<24xf32>
      %57 = vector.multi_reduction <add>, %56, %cst_42 [1] : vector<24x256xf32> to vector<24xf32>
      %58 = vector.shape_cast %57 : vector<24xf32> to vector<24x1xf32>
      %59 = arith.addf %55, %58 : vector<24x1xf32>
      %c0_43 = arith.constant 0 : index
      %c0_44 = arith.constant 0 : index
      %60 = vector.load %arg11[%c0_43, %c0_44] : memref<24x1xf32, #tpu.memory_space<vmem>>, vector<24x1xf32>
      tpu.vector_store %arg11[%c0_43, %c0_44], %59 {strides = array<i32>} : memref<24x1xf32, #tpu.memory_space<vmem>>, vector<24x1xf32>,
    } else {
    }
    %c1_i32 = arith.constant 1 : i32
    %3 = arith.cmpi eq, %arg0, %c1_i32 : i32
    %4 = arith.extui %3 : i1 to i32
    %c0_i32_1 = arith.constant 0 : i32
    %5 = arith.cmpi ne, %4, %c0_i32_1 : i32
    scf.if %5 {
      %c0 = arith.constant 0 : index
      %c0_2 = arith.constant 0 : index
      %6 = vector.load %arg10[%c0, %c0_2] : memref<24x1xf32, #tpu.memory_space<vmem>>, vector<24x1xf32>
      %cst = arith.constant 0.001953125 : f32
      %7 = vector.broadcast %cst : f32 to vector<24x1xf32>
      %8 = arith.mulf %6, %7 : vector<24x1xf32>
      %c0_3 = arith.constant 0 : index
      %c0_4 = arith.constant 0 : index
      %9 = vector.load %arg11[%c0_3, %c0_4] : memref<24x1xf32, #tpu.memory_space<vmem>>, vector<24x1xf32>
      %cst_5 = arith.constant 0.001953125 : f32
      %10 = vector.broadcast %cst_5 : f32 to vector<24x1xf32>
      %11 = arith.mulf %9, %10 : vector<24x1xf32>
      %12 = arith.mulf %8, %8 : vector<24x1xf32>
      %13 = arith.subf %11, %12 : vector<24x1xf32>
      %cst_6 = arith.constant 0.000000e+00 : f32
      %14 = vector.broadcast %cst_6 : f32 to vector<24x1xf32>
      %15 = arith.maximumf %13, %14 : vector<24x1xf32>
      %c0_7 = arith.constant 0 : index
      %c0_8 = arith.constant 0 : index
      %16 = vector.load %arg6[%c0_7, %c0_8] : memref<24x1xf32, #tpu.memory_space<vmem>>, vector<24x1xf32>
      %cst_9 = arith.constant 1.000000e-03 : f32
      %17 = vector.broadcast %cst_9 : f32 to vector<24x1xf32>
      %18 = arith.addf %15, %17 : vector<24x1xf32>
      %19 = math.rsqrt %18 : vector<24x1xf32>
      %20 = arith.mulf %16, %19 : vector<24x1xf32>
      %c0_10 = arith.constant 0 : index
      %c0_11 = arith.constant 0 : index
      %21 = vector.load %arg7[%c0_10, %c0_11] : memref<24x1xf32, #tpu.memory_space<vmem>>, vector<24x1xf32>
      %22 = arith.mulf %8, %20 : vector<24x1xf32>
      %23 = arith.subf %21, %22 : vector<24x1xf32>
      %c2_i32 = arith.constant 2 : i32
      %24 = arith.muli %arg1, %c2_i32 : i32
      %c0_i32_12 = arith.constant 0 : i32
      %25 = arith.addi %24, %c0_i32_12 : i32
      %c1_i32_13 = arith.constant 1 : i32
      %26 = arith.muli %25, %c1_i32_13 : i32
      %27 = arith.addi %26, %arg2 : i32
      %28 = arith.index_cast %27 : i32 to index
      %c0_14 = arith.constant 0 : index
      %c0_15 = arith.constant 0 : index
      %29 = vector.load %arg9[%28, %c0_14, %c0_15] : memref<2x24x256xf32, #tpu.memory_space<vmem>>, vector<1x24x256xf32>
      %30 = vector.shape_cast %29 : vector<1x24x256xf32> to vector<24x256xf32>
      %31 = vector.broadcast %20 : vector<24x1xf32> to vector<24x256xf32>
      %32 = arith.mulf %30, %31 : vector<24x256xf32>
      %33 = vector.broadcast %23 : vector<24x1xf32> to vector<24x256xf32>
      %34 = arith.addf %32, %33 : vector<24x256xf32>
      %c0_16 = arith.constant 0 : index
      %c0_17 = arith.constant 0 : index
      %35 = vector.load %arg5[%c0_16, %c0_17] : memref<88x24xf32, #tpu.memory_space<vmem>>, vector<88x24xf32>
      %cst_18 = arith.constant dense<0.000000e+00> : vector<88x256xf32>
      %36 = tpu.matmul %35, %34, %cst_18 {dimension_numbers = #tpu.dot_dimension_numbers<[1], [0], [0], [1], [0, 0, 1, 1], [], []>} : vector<88x24xf32>, vector<24x256xf32>, vector<88x256xf32> -> vector<88x256xf32>
      %c0_19 = arith.constant 0 : index
      %c0_20 = arith.constant 0 : index
      %c0_21 = arith.constant 0 : index
      %37 = vector.load %arg8[%c0_19, %c0_20, %c0_21] : memref<2x88x256xf32, #tpu.memory_space<vmem>>, vector<1x88x256xf32>
      %38 = vector.shape_cast %37 : vector<1x88x256xf32> to vector<88x256xf32>
      %39 = vector.shape_cast %36 : vector<88x256xf32> to vector<1x88x256xf32>
      tpu.vector_store %arg8[%c0_19, %c0_20, %c0_21], %39 {strides = array<i32>} : memref<2x88x256xf32, #tpu.memory_space<vmem>>, vector<1x88x256xf32>,
      %c2_i32_22 = arith.constant 2 : i32
      %40 = arith.muli %arg1, %c2_i32_22 : i32
      %c1_i32_23 = arith.constant 1 : i32
      %41 = arith.addi %40, %c1_i32_23 : i32
      %c1_i32_24 = arith.constant 1 : i32
      %42 = arith.muli %41, %c1_i32_24 : i32
      %43 = arith.addi %42, %arg2 : i32
      %44 = arith.index_cast %43 : i32 to index
      %c0_25 = arith.constant 0 : index
      %c0_26 = arith.constant 0 : index
      %45 = vector.load %arg9[%44, %c0_25, %c0_26] : memref<2x24x256xf32, #tpu.memory_space<vmem>>, vector<1x24x256xf32>
      %46 = vector.shape_cast %45 : vector<1x24x256xf32> to vector<24x256xf32>
      %47 = vector.broadcast %20 : vector<24x1xf32> to vector<24x256xf32>
      %48 = arith.mulf %46, %47 : vector<24x256xf32>
      %49 = vector.broadcast %23 : vector<24x1xf32> to vector<24x256xf32>
      %50 = arith.addf %48, %49 : vector<24x256xf32>
      %c0_27 = arith.constant 0 : index
      %c0_28 = arith.constant 0 : index
      %51 = vector.load %arg5[%c0_27, %c0_28] : memref<88x24xf32, #tpu.memory_space<vmem>>, vector<88x24xf32>
      %cst_29 = arith.constant dense<0.000000e+00> : vector<88x256xf32>
      %52 = tpu.matmul %51, %50, %cst_29 {dimension_numbers = #tpu.dot_dimension_numbers<[1], [0], [0], [1], [0, 0, 1, 1], [], []>} : vector<88x24xf32>, vector<24x256xf32>, vector<88x256xf32> -> vector<88x256xf32>
      %c1 = arith.constant 1 : index
      %c0_30 = arith.constant 0 : index
      %c0_31 = arith.constant 0 : index
      %53 = vector.load %arg8[%c1, %c0_30, %c0_31] : memref<2x88x256xf32, #tpu.memory_space<vmem>>, vector<1x88x256xf32>
      %54 = vector.shape_cast %53 : vector<1x88x256xf32> to vector<88x256xf32>
      %55 = vector.shape_cast %52 : vector<88x256xf32> to vector<1x88x256xf32>
      tpu.vector_store %arg8[%c1, %c0_30, %c0_31], %55 {strides = array<i32>} : memref<2x88x256xf32, #tpu.memory_space<vmem>>, vector<1x88x256xf32>,
    } else {
    }
    return
  }
  func.func @transform_0(%arg0: i32, %arg1: i32, %arg2: i32) -> (i32, i32, i32) {
    %c1_i32 = arith.constant 1 : i32
    %0 = arith.subi %c1_i32, %arg0 : i32
    %1 = arith.muli %arg1, %0 : i32
    %c0_i32 = arith.constant 0 : i32
    %2 = arith.muli %c0_i32, %arg0 : i32
    %3 = arith.addi %1, %2 : i32
    %4 = arith.muli %arg2, %0 : i32
    %c0_i32_0 = arith.constant 0 : i32
    %5 = arith.muli %c0_i32_0, %arg0 : i32
    %6 = arith.addi %4, %5 : i32
    %c0_i32_1 = arith.constant 0 : i32
    %c0_i32_2 = arith.constant 0 : i32
    return %3, %c0_i32_1, %6 : i32, i32, i32
  }
  func.func @transform_1(%arg0: i32, %arg1: i32, %arg2: i32) -> (i32, i32) {
    %c0_i32 = arith.constant 0 : i32
    %c0_i32_0 = arith.constant 0 : i32
    %c0_i32_1 = arith.constant 0 : i32
    return %c0_i32, %c0_i32_0 : i32, i32
  }
  func.func @transform_2(%arg0: i32, %arg1: i32, %arg2: i32) -> (i32, i32) {
    %c0_i32 = arith.constant 0 : i32
    %c0_i32_0 = arith.constant 0 : i32
    %c0_i32_1 = arith.constant 0 : i32
    return %c0_i32, %c0_i32_0 : i32, i32
  }
  func.func @transform_3(%arg0: i32, %arg1: i32, %arg2: i32) -> (i32, i32) {
    %c0_i32 = arith.constant 0 : i32
    %c0_i32_0 = arith.constant 0 : i32
    %c0_i32_1 = arith.constant 0 : i32
    return %c0_i32, %c0_i32_0 : i32, i32
  }
  func.func @transform_4(%arg0: i32, %arg1: i32, %arg2: i32) -> (i32, i32) {
    %c0_i32 = arith.constant 0 : i32
    %c0_i32_0 = arith.constant 0 : i32
    %c0_i32_1 = arith.constant 0 : i32
    return %c0_i32, %c0_i32_0 : i32, i32
  }
  func.func @transform_5(%arg0: i32, %arg1: i32, %arg2: i32) -> (i32, i32, i32) {
    %0 = arith.muli %arg1, %arg0 : i32
    %1 = arith.muli %arg2, %arg0 : i32
    %c0_i32 = arith.constant 0 : i32
    %c0_i32_0 = arith.constant 0 : i32
    return %0, %c0_i32, %1 : i32, i32, i32
  }
}

</mosaic_0001>

<llo_original>
// kernel: fused_forward.1
$region0: #{fused_forward.1}
  #allocation0 [shape = 'u32[]', space=smem, size = 0x4, offset = 0x4, fixed_abs, tag = 'smem constant byte address 0x4 - core index']
  #allocation1 [shape = 'u32[144,128]{1,0:T(1,128)}', space=vmem, size = 0x12000, scoped, tag = 'internal scratch']
  #allocation2 [shape = 'f32[2,24,256]{2,1,0:T(8,128)}', space=vmem, size = 0xc000, scoped, tag = 'scratch operand']
  #allocation3 [shape = 'f32[24,1]{1,0:T(8,128)}', space=vmem, size = 0x3000, scoped, tag = 'scratch operand']
  #allocation4 [shape = 'f32[24,1]{1,0:T(8,128)}', space=vmem, size = 0x3000, scoped, tag = 'scratch operand']
  %s0 = inlined_call_operand.vmem [shape: f32[2,72,256], index: 0, kind: input, shape index: {}]
  %s1 = inlined_call_operand.vmem [shape: f32[24,72], index: 1, kind: input, shape index: {}]
  %s2 = inlined_call_operand.vmem [shape: f32[88,24], index: 2, kind: input, shape index: {}]
  %s3 = inlined_call_operand.vmem [shape: f32[24,1], index: 3, kind: input, shape index: {}]
  %s4 = inlined_call_operand.vmem [shape: f32[24,1], index: 4, kind: input, shape index: {}]
  %s5 = inlined_call_operand.vmem [shape: f32[2,88,256], index: 5, kind: output, shape index: {}]
  %s6 = sld [smem:[#allocation0]]
  $region65: #{fused_forward.1} parent=0
    _
  %s8 = ssub.s32 1, %s6
  %s9 = scalar_select 0, %s8, %s6
  loop: start=0, step=1, limit=4
  $region2: #{fused_forward.1} parent=0 // loop_pre_header
    _
  $region3: #{fused_forward.1} parent=0 // loop_header
    %s11 = sphi 0, %s15
    %p12 = scmp.ge.s32.totalorder %s11, 4
    %s18 = sphi 0, %s37
    %s19 = sphi 0, %s33
    %s20 = sphi 0, %s29
    %s21 = sphi 0, %s18
    %s22 = sphi 0, %s19
    %s23 = sphi 0, %s20
    %s24 = sphi 0, %s21
    %s25 = sphi 0, %s22
    %s26 = sphi 0, %s23
    %s48 = sphi 0, %s50
    %s51 = sphi 0, %s48
    %s52 = sphi 0, %s51
    %s68 = sphi 0, %s52
    %s72 = sphi 0, %s72
    %s74 = sphi 0, %s72
    %s75 = sphi 0, %s74
    %s89 = sphi 0, %s75
    %s93 = sphi 0, %s93
    %s95 = sphi 0, %s93
    %s96 = sphi 0, %s95
    %s110 = sphi 0, %s96
    %s114 = sphi 0, %s114
    %s116 = sphi 0, %s114
    %s117 = sphi 0, %s116
    %s131 = sphi 0, %s117
    %s135 = sphi 0, %s135
    %s137 = sphi 0, %s135
    %s138 = sphi 0, %s137
    %s152 = sphi 0, %s138
    %s164 = sphi 0, %s166
    %s167 = sphi 0, %s164
    %s168 = sphi 0, %s167
    %s184 = sphi 0, %s168
  $region4: #{fused_forward.1} parent=0 // loop_header_branch
    %14 = sbr.rel (%p12) target = $region8
  $region5: #{fused_forward.1} parent=0 // loop_body
    %s16 = ssub.s32 %s11, 1
    %s17 = ssub.s32 %s11, 2
    %s27 = sadd.s32 1, %s20
    %p28 = scmp.ge.s32.totalorder %s27, 1
    %s29 = scalar_select %p28, 0, %s27
    %s30 = sadd.s32 1, %s19
    %s31 = scalar_select %p28, %s30, %s19
    %p32 = scmp.ge.s32.totalorder %s31, 1
    %s33 = scalar_select %p32, 0, %s31
    %s34 = sadd.s32 1, %s18
    %s35 = scalar_select %p32, %s34, %s18
    %p36 = scmp.ge.s32.totalorder %s35, 2
    %s37 = scalar_select %p36, 0, %s35
    %s38 = ssub.s32 1, %s18
    %s39 = smul.u32 %s19, %s38
    %s40 = smul.u32 %s20, %s38
    %s41 = ssub.s32 1, %s37
    %s42 = smul.u32 %s33, %s41
    %s43 = smul.u32 %s29, %s41
    %s44 = ssub.s32 %s39, %s42
    %s45 = ssub.s32 %s40, %s43
    %s46 = sor.u32 %s44, %s45
    %p47 = scmp.eq.s32.totalorder %s46, 0
    %s49 = sadd.s32 %s48, 1
    %s50 = scalar_select %p47, %s48, %s49
    %p53 = pneg %p47
    %p54 = scmp.eq.s32.totalorder %s11, 1
    %p55 = por %p53, %p54
    %p56 = scmp.ne.s32.totalorder %s48, %s51
    %p57 = scmp.eq.s32.totalorder %s11, 0
    %p58 = por %p56, %p57
    %p59 = scmp.ne.s32.totalorder %s48, %s51
    %p60 = scmp.eq.s32.totalorder %s16, 1
    %p61 = por %p59, %p60
    %p62 = scmp.ne.s32.totalorder %s51, %s52
    %p63 = scmp.eq.s32.totalorder %s16, 0
    %p64 = por %p62, %p63
    %p65 = scmp.ne.s32.totalorder %s51, %s52
    %p66 = scmp.eq.s32.totalorder %s17, 1
    %p67 = por %p65, %p66
    %p69 = scmp.ne.s32.totalorder %s52, %s68
    %p70 = scmp.eq.s32.totalorder %s17, 0
    %p71 = por %p69, %p70
    %s73 = sadd.s32 %s72, 1
    %p76 = scmp.eq.s32.totalorder %s11, 1
    %p77 = scmp.ne.s32.totalorder %s72, %s74
    %p78 = scmp.eq.s32.totalorder %s11, 0
    %p79 = por %p77, %p78
    %p80 = scmp.ne.s32.totalorder %s72, %s74
    %p81 = scmp.eq.s32.totalorder %s16, 1
    %p82 = por %p80, %p81
    %p83 = scmp.ne.s32.totalorder %s74, %s75
    %p84 = scmp.eq.s32.totalorder %s16, 0
    %p85 = por %p83, %p84
    %p86 = scmp.ne.s32.totalorder %s74, %s75
    %p87 = scmp.eq.s32.totalorder %s17, 1
    %p88 = por %p86, %p87
    %p90 = scmp.ne.s32.totalorder %s75, %s89
    %p91 = scmp.eq.s32.totalorder %s17, 0
    %p92 = por %p90, %p91
    %s94 = sadd.s32 %s93, 1
    %p97 = scmp.eq.s32.totalorder %s11, 1
    %p98 = scmp.ne.s32.totalorder %s93, %s95
    %p99 = scmp.eq.s32.totalorder %s11, 0
    %p100 = por %p98, %p99
    %p101 = scmp.ne.s32.totalorder %s93, %s95
    %p102 = scmp.eq.s32.totalorder %s16, 1
    %p103 = por %p101, %p102
    %p104 = scmp.ne.s32.totalorder %s95, %s96
    %p105 = scmp.eq.s32.totalorder %s16, 0
    %p106 = por %p104, %p105
    %p107 = scmp.ne.s32.totalorder %s95, %s96
    %p108 = scmp.eq.s32.totalorder %s17, 1
    %p109 = por %p107, %p108
    %p111 = scmp.ne.s32.totalorder %s96, %s110
    %p112 = scmp.eq.s32.totalorder %s17, 0
    %p113 = por %p111, %p112
    %s115 = sadd.s32 %s114, 1
    %p118 = scmp.eq.s32.totalorder %s11, 1
    %p119 = scmp.ne.s32.totalorder %s114, %s116
    %p120 = scmp.eq.s32.totalorder %s11, 0
    %p121 = por %p119, %p120
    %p122 = scmp.ne.s32.totalorder %s114, %s116
    %p123 = scmp.eq.s32.totalorder %s16, 1
    %p124 = por %p122, %p123
    %p125 = scmp.ne.s32.totalorder %s116, %s117
    %p126 = scmp.eq.s32.totalorder %s16, 0
    %p127 = por %p125, %p126
    %p128 = scmp.ne.s32.totalorder %s116, %s117
    %p129 = scmp.eq.s32.totalorder %s17, 1
    %p130 = por %p128, %p129
    %p132 = scmp.ne.s32.totalorder %s117, %s131
    %p133 = scmp.eq.s32.totalorder %s17, 0
    %p134 = por %p132, %p133
    %s136 = sadd.s32 %s135, 1
    %p139 = scmp.eq.s32.totalorder %s11, 1
    %p140 = scmp.ne.s32.totalorder %s135, %s137
    %p141 = scmp.eq.s32.totalorder %s11, 0
    %p142 = por %p140, %p141
    %p143 = scmp.ne.s32.totalorder %s135, %s137
    %p144 = scmp.eq.s32.totalorder %s16, 1
    %p145 = por %p143, %p144
    %p146 = scmp.ne.s32.totalorder %s137, %s138
    %p147 = scmp.eq.s32.totalorder %s16, 0
    %p148 = por %p146, %p147
    %p149 = scmp.ne.s32.totalorder %s137, %s138
    %p150 = scmp.eq.s32.totalorder %s17, 1
    %p151 = por %p149, %p150
    %p153 = scmp.ne.s32.totalorder %s138, %s152
    %p154 = scmp.eq.s32.totalorder %s17, 0
    %p155 = por %p153, %p154
    %s156 = smul.u32 %s19, %s18
    %s157 = smul.u32 %s20, %s18
    %s158 = smul.u32 %s33, %s37
    %s159 = smul.u32 %s29, %s37
    %s160 = ssub.s32 %s156, %s158
    %s161 = ssub.s32 %s157, %s159
    %s162 = sor.u32 %s160, %s161
    %p163 = scmp.eq.s32.totalorder %s162, 0
    %s165 = sadd.s32 %s164, 1
    %s166 = scalar_select %p163, %s164, %s165
    %p169 = pneg %p163
    %p170 = scmp.eq.s32.totalorder %s11, 1
    %p171 = por %p169, %p170
    %p172 = scmp.ne.s32.totalorder %s164, %s167
    %p173 = scmp.eq.s32.totalorder %s11, 0
    %p174 = por %p172, %p173
    %p175 = scmp.ne.s32.totalorder %s164, %s167
    %p176 = scmp.eq.s32.totalorder %s16, 1
    %p177 = por %p175, %p176
    %p178 = scmp.ne.s32.totalorder %s167, %s168
    %p179 = scmp.eq.s32.totalorder %s16, 0
    %p180 = por %p178, %p179
    %p181 = scmp.ne.s32.totalorder %s167, %s168
    %p182 = scmp.eq.s32.totalorder %s17, 1
    %p183 = por %p181, %p182
    %p185 = scmp.ne.s32.totalorder %s168, %s184
    %p186 = scmp.eq.s32.totalorder %s17, 0
    %p187 = por %p185, %p186
    %p188 = scmp.le.s32.totalorder 1, %s11
    %p189 = scmp.lt.s32.totalorder %s11, 3
    %p190 = pnand %p188, %p189
    %p191 = pneg %p190
    // Predicated region
    $region9: #{fused_forward.1} parent=5 // pred_check
      _
    $region10: #{fused_forward.1} parent=5 // pred_check_branch
      %193 = sbr.rel (%p190) target = $region12
    $region11: #{fused_forward.1} parent=5 // pred_region
      %s194 = ssub.s32 %s11, 1
      // Predicated region
      $region13: #{fused_forward.1} parent=11 // pred_check
        %p195 = pneg %p85
      $region14: #{fused_forward.1} parent=11 // pred_check_branch
        %197 = sbr.rel (%p195) target = $region16
      $region15: #{fused_forward.1} parent=11 // pred_region
        _
      $region16: #{fused_forward.1} parent=11 // pred_fallthru
        _
      // Predicated region
      $region17: #{fused_forward.1} parent=11 // pred_check
        %p198 = pneg %p106
      $region18: #{fused_forward.1} parent=11 // pred_check_branch
        %200 = sbr.rel (%p198) target = $region20
      $region19: #{fused_forward.1} parent=11 // pred_region
        _
      $region20: #{fused_forward.1} parent=11 // pred_fallthru
        _
      // Predicated region
      $region21: #{fused_forward.1} parent=11 // pred_check
        %p201 = pneg %p127
      $region22: #{fused_forward.1} parent=11 // pred_check_branch
        %203 = sbr.rel (%p201) target = $region24
      $region23: #{fused_forward.1} parent=11 // pred_region
        _
      $region24: #{fused_forward.1} parent=11 // pred_fallthru
        _
      // Predicated region
      $region25: #{fused_forward.1} parent=11 // pred_check
        %p204 = pneg %p148
      $region26: #{fused_forward.1} parent=11 // pred_check_branch
        %206 = sbr.rel (%p204) target = $region28
      $region27: #{fused_forward.1} parent=11 // pred_region
        _
      $region28: #{fused_forward.1} parent=11 // pred_fallthru
        _
    $region12: #{fused_forward.1} parent=5 // pred_fallthru
      _
    %p207 = scmp.lt.s32.totalorder %s11, 2
    // Predicated region
    $region29: #{fused_forward.1} parent=5 // pred_check
      %p208 = pneg %p207
    $region30: #{fused_forward.1} parent=5 // pred_check_branch
      %210 = sbr.rel (%p208) target = $region32
    $region31: #{fused_forward.1} parent=5 // pred_region
      // Predicated region
      $region33: #{fused_forward.1} parent=31 // pred_check
        %p211 = pneg %p58
      $region34: #{fused_forward.1} parent=31 // pred_check_branch
        %213 = sbr.rel (%p211) target = $region36
      $region35: #{fused_forward.1} parent=31 // pred_region
        %s214 = ssub.s32 1, %s18
        %s215 = smul.u32 %s19, %s214
        %s216 = smul.u32 %s20, %s214
        %s217 = smul.u32 2, %s215
        %s218 = smul.u32 2, %s216
        %p219 = scmp.lt.s32.totalorder %s217, 1
        %s220 = scalar_select %p219, %s217, 1
        %p221 = scmp.lt.s32.totalorder %s218, 1
        %s222 = scalar_select %p221, %s218, 1
        %s223 = smul.addr %s220, 18
        %s224 = sadd.s32 %s222, %s223
        %s225 = smul.addr %s224, 8
        %s226 = scalar_lea.vmem %s0, %s225
        %s227 = ssub.s32 1, %s18
        %s228 = smul.u32 %s19, %s227
        %s229 = smul.u32 %s20, %s227
        %s230 = smul.u32 2, %s228
        %s231 = smul.u32 2, %s229
      $region36: #{fused_forward.1} parent=31 // pred_fallthru
        _
    $region32: #{fused_forward.1} parent=5 // pred_fallthru
      _
    %p232 = scmp.le.s32.totalorder 1, %s11
    %p233 = scmp.lt.s32.totalorder %s11, 3
    %p234 = pnand %p232, %p233
    %p235 = pneg %p234
    // Predicated region
    $region37: #{fused_forward.1} parent=5 // pred_check
      _
    $region38: #{fused_forward.1} parent=5 // pred_check_branch
      %237 = sbr.rel (%p234) target = $region40
    $region39: #{fused_forward.1} parent=5 // pred_region
      %s238 = ssub.s32 %s11, 1
      %s239 = ssub.s32 1, %s21
      %s240 = smul.u32 %s22, %s239
      %s241 = smul.u32 %s23, %s239
      %s242 = smul.u32 2, %s240
      %s243 = smul.u32 2, %s241
      %p244 = scmp.lt.s32.totalorder %s242, 1
      %s245 = scalar_select %p244, %s242, 1
      %p246 = scmp.lt.s32.totalorder %s243, 1
      %s247 = scalar_select %p246, %s243, 1
      %s248 = smul.addr %s245, 18
      %s249 = sadd.s32 %s247, %s248
      %s250 = smul.addr %s249, 8
      %s251 = scalar_lea.vmem %s0, %s250
      %p252 = pneg %p64
      %p253 = pneg %p61
      %p254 = pneg %p85
      %p255 = pneg %p82
      %p256 = pneg %p106
      %p257 = pneg %p103
      %p258 = pneg %p127
      %p259 = pneg %p124
      %p260 = pneg %p148
      %p261 = pneg %p145
      %p262 = pneg %p180
      %p263 = pneg %p177
      %s264 = smul.u32 %s22, %s21
      %s265 = smul.u32 %s23, %s21
      %s266 = smul.u32 2, %s264
      %s267 = smul.u32 2, %s265
      %p268 = scmp.lt.s32.totalorder %s266, 1
      %s269 = scalar_select %p268, %s266, 1
      %p270 = scmp.lt.s32.totalorder %s267, 1
      %s271 = scalar_select %p270, %s267, 1
      %s272 = smul.addr %s269, 22
      %s273 = sadd.s32 %s271, %s272
      %s274 = smul.addr %s273, 8
      %s275 = scalar_lea.vmem %s5, %s274
      %s276 = ssub.s32 1, %s21
      %s277 = smul.u32 %s22, %s276
      %s278 = smul.u32 %s23, %s276
      %s279 = smul.u32 2, %s277
      %s280 = smul.u32 2, %s278
      %p281 = scmp.lt.s32.totalorder %s279, 1
      %s282 = scalar_select %p281, %s279, 1
      %p283 = scmp.lt.s32.totalorder %s280, 1
      %s284 = scalar_select %p283, %s280, 1
      %s285 = smul.addr %s282, 18
      %s286 = sadd.s32 %s284, %s285
      %s287 = smul.addr %s286, 8
      %s288 = scalar_lea.vmem %s0, %s287
      %s289 = ssub.s32 1, %s21
      %s290 = smul.u32 %s22, %s289
      %s291 = smul.u32 %s23, %s289
      %s292 = smul.u32 2, %s290
      %s293 = smul.u32 2, %s291
      %s294 = smul.u32 %s22, %s21
      %s295 = smul.u32 %s23, %s21
      %s296 = smul.u32 2, %s294
      %s297 = smul.u32 2, %s295
      %p298 = scmp.lt.s32.totalorder %s296, 1
      %s299 = scalar_select %p298, %s296, 1
      %p300 = scmp.lt.s32.totalorder %s297, 1
      %s301 = scalar_select %p300, %s297, 1
      %s302 = smul.addr %s299, 22
      %s303 = sadd.s32 %s301, %s302
      %s304 = smul.addr %s303, 8
      %s305 = scalar_lea.vmem %s5, %s304
      %s306 = smul.u32 %s22, %s21
      %s307 = smul.u32 %s23, %s21
      %s308 = smul.u32 2, %s306
      %s309 = smul.u32 2, %s307
      %p310 = scmp.eq.s32.totalorder %s21, 0
      // Predicated region
      $region41: #{fused_forward.1} parent=39 // pred_check
        %p311 = pneg %p310
      $region42: #{fused_forward.1} parent=39 // pred_check_branch
        %313 = sbr.rel (%p311) target = $region44
      $region43: #{fused_forward.1} parent=39 // pred_region
        %p314 = scmp.eq.s32.totalorder %s22, 0
        %p315 = scmp.eq.s32.totalorder %s23, 0
        %p316 = pnand %p314, %p315
        %p317 = pneg %p316
        // Predicated region
        $region45: #{fused_forward.1} parent=43 // pred_check
          _
        $region46: #{fused_forward.1} parent=43 // pred_check_branch
          %319 = sbr.rel (%p316) target = $region48
        $region47: #{fused_forward.1} parent=43 // pred_region
          %vm320 = vcmask 7168
          %321 = vst.msk [vmem:[#allocation3] sm:$0xff] %vm320, 0.0
          %322 = vst.msk [vmem:[#allocation3 + $0x8] sm:$0xff] %vm320, 0.0
          %323 = vst.msk [vmem:[#allocation3 + $0x10] sm:$0xff] %vm320, 0.0
          %324 = vst.msk [vmem:[#allocation4] sm:$0xff] %vm320, 0.0
          %325 = vst.msk [vmem:[#allocation4 + $0x8] sm:$0xff] %vm320, 0.0
          %326 = vst.msk [vmem:[#allocation4 + $0x10] sm:$0xff] %vm320, 0.0
        $region48: #{fused_forward.1} parent=43 // pred_fallthru
          _
        %v327 = vld [vmem:[%s288] sm:$0xff]
        %v328 = vld [vmem:[%s288 + $0x8] sm:$0xff]
        %v329 = vld [vmem:[%s288 + $0x10] sm:$0xff]
        %v330 = vld [vmem:[%s288 + $0x18] sm:$0xff]
        %v331 = vld [vmem:[%s288 + $0x20] sm:$0xff]
        %v332 = vld [vmem:[%s288 + $0x28] sm:$0xff]
        %v333 = vld [vmem:[%s288 + $0x30] sm:$0xff]
        %v334 = vld [vmem:[%s288 + $0x38] sm:$0xff]
        %v335 = vld [vmem:[%s288 + $0x40] sm:$0xff]
        %v336 = vld [vmem:[%s288 + $0x48] sm:$0xff]
        %v337 = vld [vmem:[%s288 + $0x50] sm:$0xff]
        %v338 = vld [vmem:[%s288 + $0x58] sm:$0xff]
        %v339 = vld [vmem:[%s288 + $0x60] sm:$0xff]
        %v340 = vld [vmem:[%s288 + $0x68] sm:$0xff]
        %v341 = vld [vmem:[%s288 + $0x70] sm:$0xff]
        %v342 = vld [vmem:[%s288 + $0x78] sm:$0xff]
        %v343 = vld [vmem:[%s288 + $0x80] sm:$0xff]
        %v344 = vld [vmem:[%s288 + $0x88] sm:$0xff]
        %v345 = vmax.f32 %v327, 0.0
        %v346 = vmax.f32 %v328, 0.0
        %v347 = vmax.f32 %v329, 0.0
        %v348 = vmax.f32 %v330, 0.0
        %v349 = vmax.f32 %v331, 0.0
        %v350 = vmax.f32 %v332, 0.0
        %v351 = vmax.f32 %v333, 0.0
        %v352 = vmax.f32 %v334, 0.0
        %v353 = vmax.f32 %v335, 0.0
        %v354 = vmax.f32 %v336, 0.0
        %v355 = vmax.f32 %v337, 0.0
        %v356 = vmax.f32 %v338, 0.0
        %v357 = vmax.f32 %v339, 0.0
        %v358 = vmax.f32 %v340, 0.0
        %v359 = vmax.f32 %v341, 0.0
        %v360 = vmax.f32 %v342, 0.0
        %v361 = vmax.f32 %v343, 0.0
        %v362 = vmax.f32 %v344, 0.0
        %v363 = vld [vmem:[%s1] sm:$0xff]
        %v364 = vld [vmem:[%s1 + $0x8] sm:$0xff]
        %v365 = vld [vmem:[%s1 + $0x10] sm:$0xff]
        %vm366 = vcmask 588800
        %v368 = vsel %vm366, %v363, 0
        %v371 = vsel %vm366, %v364, 0
        %v374 = vsel %vm366, %v365, 0
        %376 = vmatprep.subr.mxu0 %v346
        %377 = vmatpush1.msra.mxu0 %v345
        %378 = vmatprep.subr.mxu0 %v348
        %379 = vmatpush1.msra.mxu0 %v347
        %380 = vmatprep.subr.mxu0 %v350
        %381 = vmatpush1.msra.mxu0 %v349
        %382 = vmatprep.subr.mxu0 %v352
        %383 = vmatpush1.msra.mxu0 %v351
        %384 = vmatprep.subr.mxu0 %v354
        %385 = vmatpush1.msra.mxu0 %v353
        %386 = vmatprep.subr.mxu0 %v356
        %387 = vmatpush1.msra.mxu0 %v355
        %388 = vmatprep.subr.mxu0 %v358
        %389 = vmatpush1.msra.mxu0 %v357
        %390 = vmatprep.subr.mxu0 %v360
        %391 = vmatpush1.msra.mxu0 %v359
        %392 = vmatprep.subr.mxu0 %v362
        %393 = vmatpush1.msra.mxu0 %v361
        %394 = vmatprep.subr.mxu0 0.0
        %395 = vmatpush1.msra.mxu0 0.0
        %396 = vmatprep.subr.mxu0 0.0
        %397 = vmatpush1.msra.mxu0 0.0
        %398 = vmatprep.subr.mxu0 0.0
        %399 = vmatpush1.msra.mxu0 0.0
        %400 = vmatprep.subr.mxu0 0.0
        %401 = vmatpush1.msra.mxu0 0.0
        %402 = vmatprep.subr.mxu0 0.0
        %403 = vmatpush1.msra.mxu0 0.0
        %404 = vmatprep.subr.mxu0 0.0
        %405 = vmatpush1.msra.mxu0 0.0
        %406 = vmatprep.subr.mxu0 0.0
        %407 = vmatpush1.msra.mxu0 0.0
        %408 = vmatprep.subr.mxu0 0.0
        %409 = vmatpush1.msra.mxu0 0.0
        %410 = vmatprep.subr.mxu0 0.0
        %411 = vmatpush1.msra.mxu0 0.0
        %412 = vmatprep.subr.mxu0 0.0
        %413 = vmatpush1.msra.mxu0 0.0
        %414 = vmatprep.subr.mxu0 0.0
        %415 = vmatpush1.msra.mxu0 0.0
        %416 = vmatprep.subr.mxu0 0.0
        %417 = vmatpush1.msra.mxu0 0.0
        %418 = vmatprep.subr.mxu0 0.0
        %419 = vmatpush1.msra.mxu0 0.0
        %420 = vmatprep.subr.mxu0 0.0
        %421 = vmatpush1.msra.mxu0 0.0
        %422 = vmatprep.subr.mxu0 0.0
        %423 = vmatpush1.msra.mxu0 0.0
        %424 = vmatprep.subr.mxu0 0.0
        %425 = vmatpush1.msra.mxu0 0.0
        %426 = vmatprep.subr.mxu0 0.0
        %427 = vmatpush1.msra.mxu0 0.0
        %428 = vmatprep.subr.mxu0 0.0
        %429 = vmatpush1.msra.mxu0 0.0
        %430 = vmatprep.subr.mxu0 0.0
        %431 = vmatpush1.msra.mxu0 0.0
        %432 = vmatprep.subr.mxu0 0.0
        %433 = vmatpush1.msra.mxu0 0.0
        %434 = vmatprep.subr.mxu0 0.0
        %435 = vmatpush1.msra.mxu0 0.0
        %436 = vmatprep.subr.mxu0 0.0
        %437 = vmatpush1.msra.mxu0 0.0
        %438 = vmatprep.subr.mxu0 0.0
        %439 = vmatpush1.msra.mxu0 0.0
        %440 = vmatprep.mubr.f32.mxu0 0.0
        %441 = vmatmul.mubr.f32.gmra.mrb[0].mxu0 %v368
        %v442 = vpop.f32.mrb[0].mxu0
        %v443 = vadd.f32 0.0, %v442
        %v444 = vpop.f32.mrb[0].mxu0
        %v445 = vadd.f32 0.0, %v444
        %446 = vmatprep.mubr.f32.mxu0 0.0
        %447 = vmatmul.mubr.f32.gmra.mrb[0].mxu0 %v371
        %v448 = vpop.f32.mrb[0].mxu0
        %v449 = vadd.f32 0.0, %v448
        %v450 = vpop.f32.mrb[0].mxu0
        %v451 = vadd.f32 0.0, %v450
        %452 = vmatprep.mubr.f32.mxu0 0.0
        %453 = vmatmul.mubr.f32.gmra.mrb[0].mxu0 %v374
        %v454 = vpop.f32.mrb[0].mxu0
        %v455 = vadd.f32 0.0, %v454
        %v456 = vpop.f32.mrb[0].mxu0
        %v457 = vadd.f32 0.0, %v456
        %458 = vdwg.mxu0
        %s459 = smul.u32 %s22, 2
        %s460 = sadd.s32 %s459, %s23
        %s461 = smul.u32 %s460, 6
        %s462 = smul.addr %s461, 8
        %s463 = scalar_lea.vmem [#allocation2], %s462
        %464 = vst [vmem:[%s463] sm:$0xff] %v443
        %465 = vst [vmem:[%s463 + $0x8] sm:$0xff] %v445
        %466 = vst [vmem:[%s463 + $0x10] sm:$0xff] %v449
        %467 = vst [vmem:[%s463 + $0x18] sm:$0xff] %v451
        %468 = vst [vmem:[%s463 + $0x20] sm:$0xff] %v455
        %469 = vst [vmem:[%s463 + $0x28] sm:$0xff] %v457
        %v470 = vld [vmem:[#allocation3] sm:$0xff]
        %v471 = vld [vmem:[#allocation3 + $0x8] sm:$0xff]
        %v472 = vld [vmem:[#allocation3 + $0x10] sm:$0xff]
        %v473 = vadd.f32 %v443, %v445
        %474 = vadd.xlane.f32.xlu0 %v473
        %v475 = vpop.xlane.xlu0 %474
        %v476 = vadd.f32 %v449, %v451
        %477 = vadd.xlane.f32.xlu0 %v476
        %v478 = vpop.xlane.xlu0 %477
        %v479 = vadd.f32 %v455, %v457
        %480 = vadd.xlane.f32.xlu0 %v479
        %v481 = vpop.xlane.xlu0 %480
        %v482 = vadd.f32 %v470, %v475
        %v483 = vadd.f32 %v471, %v478
        %v484 = vadd.f32 %v472, %v481
        %vm485 = vcmask 7168
        %486 = vst.msk [vmem:[#allocation3] sm:$0xff] %vm485, %v482
        %487 = vst.msk [vmem:[#allocation3 + $0x8] sm:$0xff] %vm485, %v483
        %488 = vst.msk [vmem:[#allocation3 + $0x10] sm:$0xff] %vm485, %v484
        %v489 = vld [vmem:[#allocation4] sm:$0xff]
        %v490 = vld [vmem:[#allocation4 + $0x8] sm:$0xff]
        %v491 = vld [vmem:[#allocation4 + $0x10] sm:$0xff]
        %v492 = vmul.f32 %v443, %v443
        %v493 = vmul.f32 %v445, %v445
        %v494 = vmul.f32 %v449, %v449
        %v495 = vmul.f32 %v451, %v451
        %v496 = vmul.f32 %v455, %v455
        %v497 = vmul.f32 %v457, %v457
        %v498 = vadd.f32 %v492, %v493
        %499 = vadd.xlane.f32.xlu0 %v498
        %v500 = vpop.xlane.xlu0 %499
        %v501 = vadd.f32 %v494, %v495
        %502 = vadd.xlane.f32.xlu0 %v501
        %v503 = vpop.xlane.xlu0 %502
        %v504 = vadd.f32 %v496, %v497
        %505 = vadd.xlane.f32.xlu0 %v504
        %v506 = vpop.xlane.xlu0 %505
        %v507 = vadd.f32 %v489, %v500
        %v508 = vadd.f32 %v490, %v503
        %v509 = vadd.f32 %v491, %v506
        %510 = vst.msk [vmem:[#allocation4] sm:$0xff] %vm485, %v507
        %511 = vst.msk [vmem:[#allocation4 + $0x8] sm:$0xff] %vm485, %v508
        %512 = vst.msk [vmem:[#allocation4 + $0x10] sm:$0xff] %vm485, %v509
        %s513 = scalar_lea.vmem %s288, 144
        %v514 = vld [vmem:[%s513] sm:$0xff]
        %v515 = vld [vmem:[%s513 + $0x8] sm:$0xff]
        %v516 = vld [vmem:[%s513 + $0x10] sm:$0xff]
        %v517 = vld [vmem:[%s513 + $0x18] sm:$0xff]
        %v518 = vld [vmem:[%s513 + $0x20] sm:$0xff]
        %v519 = vld [vmem:[%s513 + $0x28] sm:$0xff]
        %v520 = vld [vmem:[%s513 + $0x30] sm:$0xff]
        %v521 = vld [vmem:[%s513 + $0x38] sm:$0xff]
        %v522 = vld [vmem:[%s513 + $0x40] sm:$0xff]
        %v523 = vld [vmem:[%s513 + $0x48] sm:$0xff]
        %v524 = vld [vmem:[%s513 + $0x50] sm:$0xff]
        %v525 = vld [vmem:[%s513 + $0x58] sm:$0xff]
        %v526 = vld [vmem:[%s513 + $0x60] sm:$0xff]
        %v527 = vld [vmem:[%s513 + $0x68] sm:$0xff]
        %v528 = vld [vmem:[%s513 + $0x70] sm:$0xff]
        %v529 = vld [vmem:[%s513 + $0x78] sm:$0xff]
        %v530 = vld [vmem:[%s513 + $0x80] sm:$0xff]
        %v531 = vld [vmem:[%s513 + $0x88] sm:$0xff]
        %v532 = vmax.f32 %v514, 0.0
        %v533 = vmax.f32 %v515, 0.0
        %v534 = vmax.f32 %v516, 0.0
        %v535 = vmax.f32 %v517, 0.0
        %v536 = vmax.f32 %v518, 0.0
        %v537 = vmax.f32 %v519, 0.0
        %v538 = vmax.f32 %v520, 0.0
        %v539 = vmax.f32 %v521, 0.0
        %v540 = vmax.f32 %v522, 0.0
        %v541 = vmax.f32 %v523, 0.0
        %v542 = vmax.f32 %v524, 0.0
        %v543 = vmax.f32 %v525, 0.0
        %v544 = vmax.f32 %v526, 0.0
        %v545 = vmax.f32 %v527, 0.0
        %v546 = vmax.f32 %v528, 0.0
        %v547 = vmax.f32 %v529, 0.0
        %v548 = vmax.f32 %v530, 0.0
        %v549 = vmax.f32 %v531, 0.0
        %v550 = vld [vmem:[%s1] sm:$0xff]
        %v551 = vld [vmem:[%s1 + $0x8] sm:$0xff]
        %v552 = vld [vmem:[%s1 + $0x10] sm:$0xff]
        %v554 = vsel %vm366, %v550, 0
        %v557 = vsel %vm366, %v551, 0
        %v560 = vsel %vm366, %v552, 0
        %562 = vmatprep.subr.mxu0 %v533
        %563 = vmatpush1.msra.mxu0 %v532
        %564 = vmatprep.subr.mxu0 %v535
        %565 = vmatpush1.msra.mxu0 %v534
        %566 = vmatprep.subr.mxu0 %v537
        %567 = vmatpush1.msra.mxu0 %v536
        %568 = vmatprep.subr.mxu0 %v539
        %569 = vmatpush1.msra.mxu0 %v538
        %570 = vmatprep.subr.mxu0 %v541
        %571 = vmatpush1.msra.mxu0 %v540
        %572 = vmatprep.subr.mxu0 %v543
        %573 = vmatpush1.msra.mxu0 %v542
        %574 = vmatprep.subr.mxu0 %v545
        %575 = vmatpush1.msra.mxu0 %v544
        %576 = vmatprep.subr.mxu0 %v547
        %577 = vmatpush1.msra.mxu0 %v546
        %578 = vmatprep.subr.mxu0 %v549
        %579 = vmatpush1.msra.mxu0 %v548
        %580 = vmatprep.subr.mxu0 0.0
        %581 = vmatpush1.msra.mxu0 0.0
        %582 = vmatprep.subr.mxu0 0.0
        %583 = vmatpush1.msra.mxu0 0.0
        %584 = vmatprep.subr.mxu0 0.0
        %585 = vmatpush1.msra.mxu0 0.0
        %586 = vmatprep.subr.mxu0 0.0
        %587 = vmatpush1.msra.mxu0 0.0
        %588 = vmatprep.subr.mxu0 0.0
        %589 = vmatpush1.msra.mxu0 0.0
        %590 = vmatprep.subr.mxu0 0.0
        %591 = vmatpush1.msra.mxu0 0.0
        %592 = vmatprep.subr.mxu0 0.0
        %593 = vmatpush1.msra.mxu0 0.0
        %594 = vmatprep.subr.mxu0 0.0
        %595 = vmatpush1.msra.mxu0 0.0
        %596 = vmatprep.subr.mxu0 0.0
        %597 = vmatpush1.msra.mxu0 0.0
        %598 = vmatprep.subr.mxu0 0.0
        %599 = vmatpush1.msra.mxu0 0.0
        %600 = vmatprep.subr.mxu0 0.0
        %601 = vmatpush1.msra.mxu0 0.0
        %602 = vmatprep.subr.mxu0 0.0
        %603 = vmatpush1.msra.mxu0 0.0
        %604 = vmatprep.subr.mxu0 0.0
        %605 = vmatpush1.msra.mxu0 0.0
        %606 = vmatprep.subr.mxu0 0.0
        %607 = vmatpush1.msra.mxu0 0.0
        %608 = vmatprep.subr.mxu0 0.0
        %609 = vmatpush1.msra.mxu0 0.0
        %610 = vmatprep.subr.mxu0 0.0
        %611 = vmatpush1.msra.mxu0 0.0
        %612 = vmatprep.subr.mxu0 0.0
        %613 = vmatpush1.msra.mxu0 0.0
        %614 = vmatprep.subr.mxu0 0.0
        %615 = vmatpush1.msra.mxu0 0.0
        %616 = vmatprep.subr.mxu0 0.0
        %617 = vmatpush1.msra.mxu0 0.0
        %618 = vmatprep.subr.mxu0 0.0
        %619 = vmatpush1.msra.mxu0 0.0
        %620 = vmatprep.subr.mxu0 0.0
        %621 = vmatpush1.msra.mxu0 0.0
        %622 = vmatprep.subr.mxu0 0.0
        %623 = vmatpush1.msra.mxu0 0.0
        %624 = vmatprep.subr.mxu0 0.0
        %625 = vmatpush1.msra.mxu0 0.0
        %626 = vmatprep.mubr.f32.mxu0 0.0
        %627 = vmatmul.mubr.f32.gmra.mrb[0].mxu0 %v554
        %v628 = vpop.f32.mrb[0].mxu0
        %v629 = vadd.f32 0.0, %v628
        %v630 = vpop.f32.mrb[0].mxu0
        %v631 = vadd.f32 0.0, %v630
        %632 = vmatprep.mubr.f32.mxu0 0.0
        %633 = vmatmul.mubr.f32.gmra.mrb[0].mxu0 %v557
        %v634 = vpop.f32.mrb[0].mxu0
        %v635 = vadd.f32 0.0, %v634
        %v636 = vpop.f32.mrb[0].mxu0
        %v637 = vadd.f32 0.0, %v636
        %638 = vmatprep.mubr.f32.mxu0 0.0
        %639 = vmatmul.mubr.f32.gmra.mrb[0].mxu0 %v560
        %v640 = vpop.f32.mrb[0].mxu0
        %v641 = vadd.f32 0.0, %v640
        %v642 = vpop.f32.mrb[0].mxu0
        %v643 = vadd.f32 0.0, %v642
        %644 = vdwg.mxu0
        %s645 = sadd.s32 %s459, 1
        %s646 = sadd.s32 %s645, %s23
        %s647 = smul.u32 %s646, 6
        %s648 = smul.addr %s647, 8
        %s649 = scalar_lea.vmem [#allocation2], %s648
        %650 = vst [vmem:[%s649] sm:$0xff] %v629
        %651 = vst [vmem:[%s649 + $0x8] sm:$0xff] %v631
        %652 = vst [vmem:[%s649 + $0x10] sm:$0xff] %v635
        %653 = vst [vmem:[%s649 + $0x18] sm:$0xff] %v637
        %654 = vst [vmem:[%s649 + $0x20] sm:$0xff] %v641
        %655 = vst [vmem:[%s649 + $0x28] sm:$0xff] %v643
        %v656 = vld [vmem:[#allocation3] sm:$0xff]
        %v657 = vld [vmem:[#allocation3 + $0x8] sm:$0xff]
        %v658 = vld [vmem:[#allocation3 + $0x10] sm:$0xff]
        %v659 = vadd.f32 %v629, %v631
        %660 = vadd.xlane.f32.xlu0 %v659
        %v661 = vpop.xlane.xlu0 %660
        %v662 = vadd.f32 %v635, %v637
        %663 = vadd.xlane.f32.xlu0 %v662
        %v664 = vpop.xlane.xlu0 %663
        %v665 = vadd.f32 %v641, %v643
        %666 = vadd.xlane.f32.xlu0 %v665
        %v667 = vpop.xlane.xlu0 %666
        %v668 = vadd.f32 %v656, %v661
        %v669 = vadd.f32 %v657, %v664
        %v670 = vadd.f32 %v658, %v667
        %671 = vst.msk [vmem:[#allocation3] sm:$0xff] %vm485, %v668
        %672 = vst.msk [vmem:[#allocation3 + $0x8] sm:$0xff] %vm485, %v669
        %673 = vst.msk [vmem:[#allocation3 + $0x10] sm:$0xff] %vm485, %v670
        %v674 = vld [vmem:[#allocation4] sm:$0xff]
        %v675 = vld [vmem:[#allocation4 + $0x8] sm:$0xff]
        %v676 = vld [vmem:[#allocation4 + $0x10] sm:$0xff]
        %v677 = vmul.f32 %v629, %v629
        %v678 = vmul.f32 %v631, %v631
        %v679 = vmul.f32 %v635, %v635
        %v680 = vmul.f32 %v637, %v637
        %v681 = vmul.f32 %v641, %v641
        %v682 = vmul.f32 %v643, %v643
        %v683 = vadd.f32 %v677, %v678
        %684 = vadd.xlane.f32.xlu0 %v683
        %v685 = vpop.xlane.xlu0 %684
        %v686 = vadd.f32 %v679, %v680
        %687 = vadd.xlane.f32.xlu0 %v686
        %v688 = vpop.xlane.xlu0 %687
        %v689 = vadd.f32 %v681, %v682
        %690 = vadd.xlane.f32.xlu0 %v689
        %v691 = vpop.xlane.xlu0 %690
        %v692 = vadd.f32 %v674, %v685
        %v693 = vadd.f32 %v675, %v688
        %v694 = vadd.f32 %v676, %v691
        %695 = vst.msk [vmem:[#allocation4] sm:$0xff] %vm485, %v692
        %696 = vst.msk [vmem:[#allocation4 + $0x8] sm:$0xff] %vm485, %v693
        %697 = vst.msk [vmem:[#allocation4 + $0x10] sm:$0xff] %vm485, %v694
      $region44: #{fused_forward.1} parent=39 // pred_fallthru
        _
      %p698 = scmp.eq.s32.totalorder %s21, 1
      // Predicated region
      $region49: #{fused_forward.1} parent=39 // pred_check
        %p699 = pneg %p698
      $region50: #{fused_forward.1} parent=39 // pred_check_branch
        %701 = sbr.rel (%p699) target = $region52
      $region51: #{fused_forward.1} parent=39 // pred_region
        %v702 = vld [vmem:[#allocation3] sm:$0xff]
        %v703 = vld [vmem:[#allocation3 + $0x8] sm:$0xff]
        %v704 = vld [vmem:[#allocation3 + $0x10] sm:$0xff]
        %v705 = vmul.f32 %v702, 0.001953125
        %v706 = vmul.f32 %v703, 0.001953125
        %v707 = vmul.f32 %v704, 0.001953125
        %v708 = vld [vmem:[#allocation4] sm:$0xff]
        %v709 = vld [vmem:[#allocation4 + $0x8] sm:$0xff]
        %v710 = vld [vmem:[#allocation4 + $0x10] sm:$0xff]
        %v711 = vmul.f32 %v708, 0.001953125
        %v712 = vmul.f32 %v709, 0.001953125
        %v713 = vmul.f32 %v710, 0.001953125
        %v714 = vmul.f32 %v705, %v705
        %v715 = vmul.f32 %v706, %v706
        %v716 = vmul.f32 %v707, %v707
        %v717 = vsub.f32 %v711, %v714
        %v718 = vsub.f32 %v712, %v715
        %v719 = vsub.f32 %v713, %v716
        %v720 = vmax.f32 %v717, 0.0
        %v721 = vmax.f32 %v718, 0.0
        %v722 = vmax.f32 %v719, 0.0
        %v723 = vld [vmem:[%s3] sm:$0xff]
        %v724 = vld [vmem:[%s3 + $0x8] sm:$0xff]
        %v725 = vld [vmem:[%s3 + $0x10] sm:$0xff]
        %v726 = vadd.f32 %v720, 0.001
        %v727 = vadd.f32 %v721, 0.001
        %v728 = vadd.f32 %v722, 0.001
        %v729 = vrsqrt.pop %v726
        %v730 = vrsqrt.pop %v727
        %v731 = vrsqrt.pop %v728
        %v732 = vmul.f32 %v723, %v729
        %v733 = vmul.f32 %v724, %v730
        %v734 = vmul.f32 %v725, %v731
        %v735 = vld [vmem:[%s4] sm:$0xff]
        %v736 = vld [vmem:[%s4 + $0x8] sm:$0xff]
        %v737 = vld [vmem:[%s4 + $0x10] sm:$0xff]
        %v738 = vmul.f32 %v705, %v732
        %v739 = vmul.f32 %v706, %v733
        %v740 = vmul.f32 %v707, %v734
        %v741 = vsub.f32 %v735, %v738
        %v742 = vsub.f32 %v736, %v739
        %v743 = vsub.f32 %v737, %v740
        %s744 = smul.u32 %s22, 2
        %s745 = sadd.s32 %s744, %s23
        %s746 = smul.u32 %s745, 6
        %s747 = smul.addr %s746, 8
        %s748 = scalar_lea.vmem [#allocation2], %s747
        %v749 = vld [vmem:[%s748] sm:$0xff]
        %v750 = vld [vmem:[%s748 + $0x8] sm:$0xff]
        %v751 = vld [vmem:[%s748 + $0x10] sm:$0xff]
        %v752 = vld [vmem:[%s748 + $0x18] sm:$0xff]
        %v753 = vld [vmem:[%s748 + $0x20] sm:$0xff]
        %v754 = vld [vmem:[%s748 + $0x28] sm:$0xff]
        %756 = vset.pattern.permute.xlu0 0
        %757 = vperm.xlu0 %756, %v732
        %v758 = vpop.permute.xlu0 %757
        %761 = vset.pattern.permute.xlu0 0
        %762 = vperm.xlu0 %761, %v733
        %v763 = vpop.permute.xlu0 %762
        %766 = vset.pattern.permute.xlu0 0
        %767 = vperm.xlu0 %766, %v734
        %v768 = vpop.permute.xlu0 %767
        %v770 = vmul.f32 %v749, %v758
        %v771 = vmul.f32 %v750, %v758
        %v772 = vmul.f32 %v751, %v763
        %v773 = vmul.f32 %v752, %v763
        %v774 = vmul.f32 %v753, %v768
        %v775 = vmul.f32 %v754, %v768
        %777 = vset.pattern.permute.xlu0 0
        %778 = vperm.xlu0 %777, %v741
        %v779 = vpop.permute.xlu0 %778
        %782 = vset.pattern.permute.xlu0 0
        %783 = vperm.xlu0 %782, %v742
        %v784 = vpop.permute.xlu0 %783
        %787 = vset.pattern.permute.xlu0 0
        %788 = vperm.xlu0 %787, %v743
        %v789 = vpop.permute.xlu0 %788
        %v791 = vadd.f32 %v770, %v779
        %v792 = vadd.f32 %v771, %v779
        %v793 = vadd.f32 %v772, %v784
        %v794 = vadd.f32 %v773, %v784
        %v795 = vadd.f32 %v774, %v789
        %v796 = vadd.f32 %v775, %v789
        %v797 = vld [vmem:[%s2] sm:$0xff]
        %v798 = vld [vmem:[%s2 + $0x8] sm:$0xff]
        %v799 = vld [vmem:[%s2 + $0x10] sm:$0xff]
        %v800 = vld [vmem:[%s2 + $0x18] sm:$0xff]
        %v801 = vld [vmem:[%s2 + $0x20] sm:$0xff]
        %v802 = vld [vmem:[%s2 + $0x28] sm:$0xff]
        %v803 = vld [vmem:[%s2 + $0x30] sm:$0xff]
        %v804 = vld [vmem:[%s2 + $0x38] sm:$0xff]
        %v805 = vld [vmem:[%s2 + $0x40] sm:$0xff]
        %v806 = vld [vmem:[%s2 + $0x48] sm:$0xff]
        %v807 = vld [vmem:[%s2 + $0x50] sm:$0xff]
        %vm808 = vcmask 195584
        %v810 = vsel %vm808, %v797, 0
        %v813 = vsel %vm808, %v798, 0
        %v816 = vsel %vm808, %v799, 0
        %v819 = vsel %vm808, %v800, 0
        %v822 = vsel %vm808, %v801, 0
        %v825 = vsel %vm808, %v802, 0
        %v828 = vsel %vm808, %v803, 0
        %v831 = vsel %vm808, %v804, 0
        %v834 = vsel %vm808, %v805, 0
        %v837 = vsel %vm808, %v806, 0
        %v840 = vsel %vm808, %v807, 0
        %842 = vmatprep.subr.mxu0 %v792
        %843 = vmatpush1.msra.mxu0 %v791
        %844 = vmatprep.subr.mxu0 %v794
        %845 = vmatpush1.msra.mxu0 %v793
        %846 = vmatprep.subr.mxu0 %v796
        %847 = vmatpush1.msra.mxu0 %v795
        %848 = vmatprep.subr.mxu0 0.0
        %849 = vmatpush1.msra.mxu0 0.0
        %850 = vmatprep.subr.mxu0 0.0
        %851 = vmatpush1.msra.mxu0 0.0
        %852 = vmatprep.subr.mxu0 0.0
        %853 = vmatpush1.msra.mxu0 0.0
        %854 = vmatprep.subr.mxu0 0.0
        %855 = vmatpush1.msra.mxu0 0.0
        %856 = vmatprep.subr.mxu0 0.0
        %857 = vmatpush1.msra.mxu0 0.0
        %858 = vmatprep.subr.mxu0 0.0
        %859 = vmatpush1.msra.mxu0 0.0
        %860 = vmatprep.subr.mxu0 0.0
        %861 = vmatpush1.msra.mxu0 0.0
        %862 = vmatprep.subr.mxu0 0.0
        %863 = vmatpush1.msra.mxu0 0.0
        %864 = vmatprep.subr.mxu0 0.0
        %865 = vmatpush1.msra.mxu0 0.0
        %866 = vmatprep.subr.mxu0 0.0
        %867 = vmatpush1.msra.mxu0 0.0
        %868 = vmatprep.subr.mxu0 0.0
        %869 = vmatpush1.msra.mxu0 0.0
        %870 = vmatprep.subr.mxu0 0.0
        %871 = vmatpush1.msra.mxu0 0.0
        %872 = vmatprep.subr.mxu0 0.0
        %873 = vmatpush1.msra.mxu0 0.0
        %874 = vmatprep.subr.mxu0 0.0
        %875 = vmatpush1.msra.mxu0 0.0
        %876 = vmatprep.subr.mxu0 0.0
        %877 = vmatpush1.msra.mxu0 0.0
        %878 = vmatprep.subr.mxu0 0.0
        %879 = vmatpush1.msra.mxu0 0.0
        %880 = vmatprep.subr.mxu0 0.0
        %881 = vmatpush1.msra.mxu0 0.0
        %882 = vmatprep.subr.mxu0 0.0
        %883 = vmatpush1.msra.mxu0 0.0
        %884 = vmatprep.subr.mxu0 0.0
        %885 = vmatpush1.msra.mxu0 0.0
        %886 = vmatprep.subr.mxu0 0.0
        %887 = vmatpush1.msra.mxu0 0.0
        %888 = vmatprep.subr.mxu0 0.0
        %889 = vmatpush1.msra.mxu0 0.0
        %890 = vmatprep.subr.mxu0 0.0
        %891 = vmatpush1.msra.mxu0 0.0
        %892 = vmatprep.subr.mxu0 0.0
        %893 = vmatpush1.msra.mxu0 0.0
        %894 = vmatprep.subr.mxu0 0.0
        %895 = vmatpush1.msra.mxu0 0.0
        %896 = vmatprep.subr.mxu0 0.0
        %897 = vmatpush1.msra.mxu0 0.0
        %898 = vmatprep.subr.mxu0 0.0
        %899 = vmatpush1.msra.mxu0 0.0
        %900 = vmatprep.subr.mxu0 0.0
        %901 = vmatpush1.msra.mxu0 0.0
        %902 = vmatprep.subr.mxu0 0.0
        %903 = vmatpush1.msra.mxu0 0.0
        %904 = vmatprep.subr.mxu0 0.0
        %905 = vmatpush1.msra.mxu0 0.0
        %906 = vmatprep.mubr.f32.mxu0 0.0
        %907 = vmatmul.mubr.f32.gmra.mrb[0].mxu0 %v810
        %v908 = vpop.f32.mrb[0].mxu0
        %v909 = vadd.f32 0.0, %v908
        %v910 = vpop.f32.mrb[0].mxu0
        %v911 = vadd.f32 0.0, %v910
        %912 = vmatprep.mubr.f32.mxu0 0.0
        %913 = vmatmul.mubr.f32.gmra.mrb[0].mxu0 %v813
        %v914 = vpop.f32.mrb[0].mxu0
        %v915 = vadd.f32 0.0, %v914
        %v916 = vpop.f32.mrb[0].mxu0
        %v917 = vadd.f32 0.0, %v916
        %918 = vmatprep.mubr.f32.mxu0 0.0
        %919 = vmatmul.mubr.f32.gmra.mrb[0].mxu0 %v816
        %v920 = vpop.f32.mrb[0].mxu0
        %v921 = vadd.f32 0.0, %v920
        %v922 = vpop.f32.mrb[0].mxu0
        %v923 = vadd.f32 0.0, %v922
        %924 = vmatprep.mubr.f32.mxu0 0.0
        %925 = vmatmul.mubr.f32.gmra.mrb[0].mxu0 %v819
        %v926 = vpop.f32.mrb[0].mxu0
        %v927 = vadd.f32 0.0, %v926
        %v928 = vpop.f32.mrb[0].mxu0
        %v929 = vadd.f32 0.0, %v928
        %930 = vmatprep.mubr.f32.mxu0 0.0
        %931 = vmatmul.mubr.f32.gmra.mrb[0].mxu0 %v822
        %v932 = vpop.f32.mrb[0].mxu0
        %v933 = vadd.f32 0.0, %v932
        %v934 = vpop.f32.mrb[0].mxu0
        %v935 = vadd.f32 0.0, %v934
        %936 = vmatprep.mubr.f32.mxu0 0.0
        %937 = vmatmul.mubr.f32.gmra.mrb[0].mxu0 %v825
        %v938 = vpop.f32.mrb[0].mxu0
        %v939 = vadd.f32 0.0, %v938
        %v940 = vpop.f32.mrb[0].mxu0
        %v941 = vadd.f32 0.0, %v940
        %942 = vmatprep.mubr.f32.mxu0 0.0
        %943 = vmatmul.mubr.f32.gmra.mrb[0].mxu0 %v828
        %v944 = vpop.f32.mrb[0].mxu0
        %v945 = vadd.f32 0.0, %v944
        %v946 = vpop.f32.mrb[0].mxu0
        %v947 = vadd.f32 0.0, %v946
        %948 = vmatprep.mubr.f32.mxu0 0.0
        %949 = vmatmul.mubr.f32.gmra.mrb[0].mxu0 %v831
        %v950 = vpop.f32.mrb[0].mxu0
        %v951 = vadd.f32 0.0, %v950
        %v952 = vpop.f32.mrb[0].mxu0
        %v953 = vadd.f32 0.0, %v952
        %954 = vmatprep.mubr.f32.mxu0 0.0
        %955 = vmatmul.mubr.f32.gmra.mrb[0].mxu0 %v834
        %v956 = vpop.f32.mrb[0].mxu0
        %v957 = vadd.f32 0.0, %v956
        %v958 = vpop.f32.mrb[0].mxu0
        %v959 = vadd.f32 0.0, %v958
        %960 = vmatprep.mubr.f32.mxu0 0.0
        %961 = vmatmul.mubr.f32.gmra.mrb[0].mxu0 %v837
        %v962 = vpop.f32.mrb[0].mxu0
        %v963 = vadd.f32 0.0, %v962
        %v964 = vpop.f32.mrb[0].mxu0
        %v965 = vadd.f32 0.0, %v964
        %966 = vmatprep.mubr.f32.mxu0 0.0
        %967 = vmatmul.mubr.f32.gmra.mrb[0].mxu0 %v840
        %v968 = vpop.f32.mrb[0].mxu0
        %v969 = vadd.f32 0.0, %v968
        %v970 = vpop.f32.mrb[0].mxu0
        %v971 = vadd.f32 0.0, %v970
        %972 = vdwg.mxu0
        %973 = vst [vmem:[%s305] sm:$0xff] %v909
        %974 = vst [vmem:[%s305 + $0x8] sm:$0xff] %v911
        %975 = vst [vmem:[%s305 + $0x10] sm:$0xff] %v915
        %976 = vst [vmem:[%s305 + $0x18] sm:$0xff] %v917
        %977 = vst [vmem:[%s305 + $0x20] sm:$0xff] %v921
        %978 = vst [vmem:[%s305 + $0x28] sm:$0xff] %v923
        %979 = vst [vmem:[%s305 + $0x30] sm:$0xff] %v927
        %980 = vst [vmem:[%s305 + $0x38] sm:$0xff] %v929
        %981 = vst [vmem:[%s305 + $0x40] sm:$0xff] %v933
        %982 = vst [vmem:[%s305 + $0x48] sm:$0xff] %v935
        %983 = vst [vmem:[%s305 + $0x50] sm:$0xff] %v939
        %984 = vst [vmem:[%s305 + $0x58] sm:$0xff] %v941
        %985 = vst [vmem:[%s305 + $0x60] sm:$0xff] %v945
        %986 = vst [vmem:[%s305 + $0x68] sm:$0xff] %v947
        %987 = vst [vmem:[%s305 + $0x70] sm:$0xff] %v951
        %988 = vst [vmem:[%s305 + $0x78] sm:$0xff] %v953
        %989 = vst [vmem:[%s305 + $0x80] sm:$0xff] %v957
        %990 = vst [vmem:[%s305 + $0x88] sm:$0xff] %v959
        %991 = vst [vmem:[%s305 + $0x90] sm:$0xff] %v963
        %992 = vst [vmem:[%s305 + $0x98] sm:$0xff] %v965
        %993 = vst [vmem:[%s305 + $0xa0] sm:$0xff] %v969
        %994 = vst [vmem:[%s305 + $0xa8] sm:$0xff] %v971
        %s995 = sadd.s32 %s744, 1
        %s996 = sadd.s32 %s995, %s23
        %s997 = smul.u32 %s996, 6
        %s998 = smul.addr %s997, 8
        %s999 = scalar_lea.vmem [#allocation2], %s998
        %v1000 = vld [vmem:[%s999] sm:$0xff]
        %v1001 = vld [vmem:[%s999 + $0x8] sm:$0xff]
        %v1002 = vld [vmem:[%s999 + $0x10] sm:$0xff]
        %v1003 = vld [vmem:[%s999 + $0x18] sm:$0xff]
        %v1004 = vld [vmem:[%s999 + $0x20] sm:$0xff]
        %v1005 = vld [vmem:[%s999 + $0x28] sm:$0xff]
        %v1006 = vmul.f32 %v1000, %v758
        %v1007 = vmul.f32 %v1001, %v758
        %v1008 = vmul.f32 %v1002, %v763
        %v1009 = vmul.f32 %v1003, %v763
        %v1010 = vmul.f32 %v1004, %v768
        %v1011 = vmul.f32 %v1005, %v768
        %v1012 = vadd.f32 %v1006, %v779
        %v1013 = vadd.f32 %v1007, %v779
        %v1014 = vadd.f32 %v1008, %v784
        %v1015 = vadd.f32 %v1009, %v784
        %v1016 = vadd.f32 %v1010, %v789
        %v1017 = vadd.f32 %v1011, %v789
        %v1018 = vld [vmem:[%s2] sm:$0xff]
        %v1019 = vld [vmem:[%s2 + $0x8] sm:$0xff]
        %v1020 = vld [vmem:[%s2 + $0x10] sm:$0xff]
        %v1021 = vld [vmem:[%s2 + $0x18] sm:$0xff]
        %v1022 = vld [vmem:[%s2 + $0x20] sm:$0xff]
        %v1023 = vld [vmem:[%s2 + $0x28] sm:$0xff]
        %v1024 = vld [vmem:[%s2 + $0x30] sm:$0xff]
        %v1025 = vld [vmem:[%s2 + $0x38] sm:$0xff]
        %v1026 = vld [vmem:[%s2 + $0x40] sm:$0xff]
        %v1027 = vld [vmem:[%s2 + $0x48] sm:$0xff]
        %v1028 = vld [vmem:[%s2 + $0x50] sm:$0xff]
        %v1030 = vsel %vm808, %v1018, 0
        %v1033 = vsel %vm808, %v1019, 0
        %v1036 = vsel %vm808, %v1020, 0
        %v1039 = vsel %vm808, %v1021, 0
        %v1042 = vsel %vm808, %v1022, 0
        %v1045 = vsel %vm808, %v1023, 0
        %v1048 = vsel %vm808, %v1024, 0
        %v1051 = vsel %vm808, %v1025, 0
        %v1054 = vsel %vm808, %v1026, 0
        %v1057 = vsel %vm808, %v1027, 0
        %v1060 = vsel %vm808, %v1028, 0
        %1062 = vmatprep.subr.mxu0 %v1013
        %1063 = vmatpush1.msra.mxu0 %v1012
        %1064 = vmatprep.subr.mxu0 %v1015
        %1065 = vmatpush1.msra.mxu0 %v1014
        %1066 = vmatprep.subr.mxu0 %v1017
        %1067 = vmatpush1.msra.mxu0 %v1016
        %1068 = vmatprep.subr.mxu0 0.0
        %1069 = vmatpush1.msra.mxu0 0.0
        %1070 = vmatprep.subr.mxu0 0.0
        %1071 = vmatpush1.msra.mxu0 0.0
        %1072 = vmatprep.subr.mxu0 0.0
        %1073 = vmatpush1.msra.mxu0 0.0
        %1074 = vmatprep.subr.mxu0 0.0
        %1075 = vmatpush1.msra.mxu0 0.0
        %1076 = vmatprep.subr.mxu0 0.0
        %1077 = vmatpush1.msra.mxu0 0.0
        %1078 = vmatprep.subr.mxu0 0.0
        %1079 = vmatpush1.msra.mxu0 0.0
        %1080 = vmatprep.subr.mxu0 0.0
        %1081 = vmatpush1.msra.mxu0 0.0
        %1082 = vmatprep.subr.mxu0 0.0
        %1083 = vmatpush1.msra.mxu0 0.0
        %1084 = vmatprep.subr.mxu0 0.0
        %1085 = vmatpush1.msra.mxu0 0.0
        %1086 = vmatprep.subr.mxu0 0.0
        %1087 = vmatpush1.msra.mxu0 0.0
        %1088 = vmatprep.subr.mxu0 0.0
        %1089 = vmatpush1.msra.mxu0 0.0
        %1090 = vmatprep.subr.mxu0 0.0
        %1091 = vmatpush1.msra.mxu0 0.0
        %1092 = vmatprep.subr.mxu0 0.0
        %1093 = vmatpush1.msra.mxu0 0.0
        %1094 = vmatprep.subr.mxu0 0.0
        %1095 = vmatpush1.msra.mxu0 0.0
        %1096 = vmatprep.subr.mxu0 0.0
        %1097 = vmatpush1.msra.mxu0 0.0
        %1098 = vmatprep.subr.mxu0 0.0
        %1099 = vmatpush1.msra.mxu0 0.0
        %1100 = vmatprep.subr.mxu0 0.0
        %1101 = vmatpush1.msra.mxu0 0.0
        %1102 = vmatprep.subr.mxu0 0.0
        %1103 = vmatpush1.msra.mxu0 0.0
        %1104 = vmatprep.subr.mxu0 0.0
        %1105 = vmatpush1.msra.mxu0 0.0
        %1106 = vmatprep.subr.mxu0 0.0
        %1107 = vmatpush1.msra.mxu0 0.0
        %1108 = vmatprep.subr.mxu0 0.0
        %1109 = vmatpush1.msra.mxu0 0.0
        %1110 = vmatprep.subr.mxu0 0.0
        %1111 = vmatpush1.msra.mxu0 0.0
        %1112 = vmatprep.subr.mxu0 0.0
        %1113 = vmatpush1.msra.mxu0 0.0
        %1114 = vmatprep.subr.mxu0 0.0
        %1115 = vmatpush1.msra.mxu0 0.0
        %1116 = vmatprep.subr.mxu0 0.0
        %1117 = vmatpush1.msra.mxu0 0.0
        %1118 = vmatprep.subr.mxu0 0.0
        %1119 = vmatpush1.msra.mxu0 0.0
        %1120 = vmatprep.subr.mxu0 0.0
        %1121 = vmatpush1.msra.mxu0 0.0
        %1122 = vmatprep.subr.mxu0 0.0
        %1123 = vmatpush1.msra.mxu0 0.0
        %1124 = vmatprep.subr.mxu0 0.0
        %1125 = vmatpush1.msra.mxu0 0.0
        %1126 = vmatprep.mubr.f32.mxu0 0.0
        %1127 = vmatmul.mubr.f32.gmra.mrb[0].mxu0 %v1030
        %v1128 = vpop.f32.mrb[0].mxu0
        %v1129 = vadd.f32 0.0, %v1128
        %v1130 = vpop.f32.mrb[0].mxu0
        %v1131 = vadd.f32 0.0, %v1130
        %1132 = vmatprep.mubr.f32.mxu0 0.0
        %1133 = vmatmul.mubr.f32.gmra.mrb[0].mxu0 %v1033
        %v1134 = vpop.f32.mrb[0].mxu0
        %v1135 = vadd.f32 0.0, %v1134
        %v1136 = vpop.f32.mrb[0].mxu0
        %v1137 = vadd.f32 0.0, %v1136
        %1138 = vmatprep.mubr.f32.mxu0 0.0
        %1139 = vmatmul.mubr.f32.gmra.mrb[0].mxu0 %v1036
        %v1140 = vpop.f32.mrb[0].mxu0
        %v1141 = vadd.f32 0.0, %v1140
        %v1142 = vpop.f32.mrb[0].mxu0
        %v1143 = vadd.f32 0.0, %v1142
        %1144 = vmatprep.mubr.f32.mxu0 0.0
        %1145 = vmatmul.mubr.f32.gmra.mrb[0].mxu0 %v1039
        %v1146 = vpop.f32.mrb[0].mxu0
        %v1147 = vadd.f32 0.0, %v1146
        %v1148 = vpop.f32.mrb[0].mxu0
        %v1149 = vadd.f32 0.0, %v1148
        %1150 = vmatprep.mubr.f32.mxu0 0.0
        %1151 = vmatmul.mubr.f32.gmra.mrb[0].mxu0 %v1042
        %v1152 = vpop.f32.mrb[0].mxu0
        %v1153 = vadd.f32 0.0, %v1152
        %v1154 = vpop.f32.mrb[0].mxu0
        %v1155 = vadd.f32 0.0, %v1154
        %1156 = vmatprep.mubr.f32.mxu0 0.0
        %1157 = vmatmul.mubr.f32.gmra.mrb[0].mxu0 %v1045
        %v1158 = vpop.f32.mrb[0].mxu0
        %v1159 = vadd.f32 0.0, %v1158
        %v1160 = vpop.f32.mrb[0].mxu0
        %v1161 = vadd.f32 0.0, %v1160
        %1162 = vmatprep.mubr.f32.mxu0 0.0
        %1163 = vmatmul.mubr.f32.gmra.mrb[0].mxu0 %v1048
        %v1164 = vpop.f32.mrb[0].mxu0
        %v1165 = vadd.f32 0.0, %v1164
        %v1166 = vpop.f32.mrb[0].mxu0
        %v1167 = vadd.f32 0.0, %v1166
        %1168 = vmatprep.mubr.f32.mxu0 0.0
        %1169 = vmatmul.mubr.f32.gmra.mrb[0].mxu0 %v1051
        %v1170 = vpop.f32.mrb[0].mxu0
        %v1171 = vadd.f32 0.0, %v1170
        %v1172 = vpop.f32.mrb[0].mxu0
        %v1173 = vadd.f32 0.0, %v1172
        %1174 = vmatprep.mubr.f32.mxu0 0.0
        %1175 = vmatmul.mubr.f32.gmra.mrb[0].mxu0 %v1054
        %v1176 = vpop.f32.mrb[0].mxu0
        %v1177 = vadd.f32 0.0, %v1176
        %v1178 = vpop.f32.mrb[0].mxu0
        %v1179 = vadd.f32 0.0, %v1178
        %1180 = vmatprep.mubr.f32.mxu0 0.0
        %1181 = vmatmul.mubr.f32.gmra.mrb[0].mxu0 %v1057
        %v1182 = vpop.f32.mrb[0].mxu0
        %v1183 = vadd.f32 0.0, %v1182
        %v1184 = vpop.f32.mrb[0].mxu0
        %v1185 = vadd.f32 0.0, %v1184
        %1186 = vmatprep.mubr.f32.mxu0 0.0
        %1187 = vmatmul.mubr.f32.gmra.mrb[0].mxu0 %v1060
        %v1188 = vpop.f32.mrb[0].mxu0
        %v1189 = vadd.f32 0.0, %v1188
        %v1190 = vpop.f32.mrb[0].mxu0
        %v1191 = vadd.f32 0.0, %v1190
        %1192 = vdwg.mxu0
        %s1193 = scalar_lea.vmem %s305, 176
        %1194 = vst [vmem:[%s1193] sm:$0xff] %v1129
        %1195 = vst [vmem:[%s1193 + $0x8] sm:$0xff] %v1131
        %1196 = vst [vmem:[%s1193 + $0x10] sm:$0xff] %v1135
        %1197 = vst [vmem:[%s1193 + $0x18] sm:$0xff] %v1137
        %1198 = vst [vmem:[%s1193 + $0x20] sm:$0xff] %v1141
        %1199 = vst [vmem:[%s1193 + $0x28] sm:$0xff] %v1143
        %1200 = vst [vmem:[%s1193 + $0x30] sm:$0xff] %v1147
        %1201 = vst [vmem:[%s1193 + $0x38] sm:$0xff] %v1149
        %1202 = vst [vmem:[%s1193 + $0x40] sm:$0xff] %v1153
        %1203 = vst [vmem:[%s1193 + $0x48] sm:$0xff] %v1155
        %1204 = vst [vmem:[%s1193 + $0x50] sm:$0xff] %v1159
        %1205 = vst [vmem:[%s1193 + $0x58] sm:$0xff] %v1161
        %1206 = vst [vmem:[%s1193 + $0x60] sm:$0xff] %v1165
        %1207 = vst [vmem:[%s1193 + $0x68] sm:$0xff] %v1167
        %1208 = vst [vmem:[%s1193 + $0x70] sm:$0xff] %v1171
        %1209 = vst [vmem:[%s1193 + $0x78] sm:$0xff] %v1173
        %1210 = vst [vmem:[%s1193 + $0x80] sm:$0xff] %v1177
        %1211 = vst [vmem:[%s1193 + $0x88] sm:$0xff] %v1179
        %1212 = vst [vmem:[%s1193 + $0x90] sm:$0xff] %v1183
        %1213 = vst [vmem:[%s1193 + $0x98] sm:$0xff] %v1185
        %1214 = vst [vmem:[%s1193 + $0xa0] sm:$0xff] %v1189
        %1215 = vst [vmem:[%s1193 + $0xa8] sm:$0xff] %v1191
      $region52: #{fused_forward.1} parent=39 // pred_fallthru
        _
      %s1216 = smul.u32 %s22, %s21
      %s1217 = smul.u32 %s23, %s21
      %s1218 = smul.u32 2, %s1216
      %s1219 = smul.u32 2, %s1217
      %p1220 = scmp.lt.s32.totalorder %s1218, 1
      %s1221 = scalar_select %p1220, %s1218, 1
      %p1222 = scmp.lt.s32.totalorder %s1219, 1
      %s1223 = scalar_select %p1222, %s1219, 1
      %s1224 = smul.addr %s1221, 22
      %s1225 = sadd.s32 %s1223, %s1224
      %s1226 = smul.addr %s1225, 8
      %s1227 = scalar_lea.vmem %s5, %s1226
      // Predicated region
      $region53: #{fused_forward.1} parent=39 // pred_check
        %p1228 = pneg %p177
      $region54: #{fused_forward.1} parent=39 // pred_check_branch
        %1230 = sbr.rel (%p1228) target = $region56
      $region55: #{fused_forward.1} parent=39 // pred_region
        %s1231 = smul.u32 %s22, %s21
        %s1232 = smul.u32 %s23, %s21
        %s1233 = smul.u32 2, %s1231
        %s1234 = smul.u32 2, %s1232
      $region56: #{fused_forward.1} parent=39 // pred_fallthru
        _
    $region40: #{fused_forward.1} parent=5 // pred_fallthru
      _
    %p1235 = scmp.le.s32.totalorder 2, %s11
    // Predicated region
    $region57: #{fused_forward.1} parent=5 // pred_check
      %p1236 = pneg %p1235
    $region58: #{fused_forward.1} parent=5 // pred_check_branch
      %1238 = sbr.rel (%p1236) target = $region60
    $region59: #{fused_forward.1} parent=5 // pred_region
      %s1239 = ssub.s32 %s11, 2
      // Predicated region
      $region61: #{fused_forward.1} parent=59 // pred_check
        %p1240 = pneg %p183
      $region62: #{fused_forward.1} parent=59 // pred_check_branch
        %1242 = sbr.rel (%p1240) target = $region64
      $region63: #{fused_forward.1} parent=59 // pred_region
        %s1243 = smul.u32 %s25, %s24
        %s1244 = smul.u32 %s26, %s24
        %s1245 = smul.u32 2, %s1243
        %s1246 = smul.u32 2, %s1244
        %p1247 = scmp.lt.s32.totalorder %s1245, 1
        %s1248 = scalar_select %p1247, %s1245, 1
        %p1249 = scmp.lt.s32.totalorder %s1246, 1
        %s1250 = scalar_select %p1249, %s1246, 1
        %s1251 = smul.addr %s1248, 22
        %s1252 = sadd.s32 %s1250, %s1251
        %s1253 = smul.addr %s1252, 8
        %s1254 = scalar_lea.vmem %s5, %s1253
      $region64: #{fused_forward.1} parent=59 // pred_fallthru
        _
    $region60: #{fused_forward.1} parent=5 // pred_fallthru
      _
  $region6: #{fused_forward.1} parent=0 // loop_footer
    %s15 = sadd.s32 1, %s11
  $region7: #{fused_forward.1} parent=0 // loop_footer_branch
    %10 = sbr.rel target = $region3
  $region8: #{fused_forward.1} parent=0 // loop_exit
    _

</llo_original>
